<compile_context>
chip_gen: v5e
topology: v5e:2x2
jax: 0.10.0
libtpu: 0.0.40
codegen_flags: <defaults>
</compile_context>

<pallas_src>
import functools
import numpy as np
import jax
import jax.numpy as jnp
from jax.experimental import pallas as pl
from jax.experimental.pallas import tpu as pltpu

# ----------------- config (small shapes implied by the forward) -----------------
VOCAB = 256          # llm vocab size
DIM = 128            # llm hidden size (padded to full 128-lane width)
IMG_DIM = 128        # image embed dim (== output_resampler.embed_dim); == DIM
NUM_QUERIES = 4      # input_resampler.num_queries == output_resampler.num_queries
BZ, SQ = 2, 16
HEADN = VOCAB + IMG_DIM          # fused [LM head | output_resampler] width
LM_LOSS_SCALE = 1.0
REC_LOSS_SCALE = 1.0


# ----------------------------- fused Pallas kernel -----------------------------
def _fused_lvlm_kernel(toks_ref, srcs_ref, img_ref, embed_ref, wstack_ref,
                       whead_ref, bias_ref, loss_ref, *recon_refs,
                       lm_scale, rec_scale):
    f32 = jnp.float32
    bf16 = jnp.bfloat16
    T = toks_ref.shape[0]
    vocab, dim = embed_ref.shape

    toks = toks_ref[...]                      # (T, 4) int32 packed per-token metadata
    ids = toks[:, 0:1]                        # token ids
    sl = toks[:, 1:2]                         # HF-shifted labels (-100 = ignore)
    dr_cmp = toks[:, 2:3]                     # masked rank of <img> cmp slots (0 = not a slot)
    dr_gen = toks[:, 3:4]                     # masked rank of <img> gen slots
    srcs = srcs_ref[...]                      # (2, SPAD) int32 packed per-source ranks
    sr_cmp = srcs[0:1, :]                     # masked rank of cmp image-query rows (-1 = invalid)
    sr_gen = srcs[1:2, :]

    bias = bias_ref[...]                      # (4, HEADN) f32 packed biases
    b_ir = bias[0:1, :dim]
    b1 = bias[1:2, :dim]
    b2 = bias[2:3, :dim]
    b_head = bias[3:4, :]

    wir = wstack_ref[0:dim, :]                # bf16 weights, pre-packed [w_in_res; w1; w2]
    w1 = wstack_ref[dim:2 * dim, :]
    w2 = wstack_ref[2 * dim:3 * dim, :]

    # ---- token embedding: exact one-hot row select on the MXU (0/1 rows -> exact)
    vcol = jax.lax.broadcasted_iota(jnp.int32, (T, vocab), 1)
    tok_oh = (vcol == ids).astype(f32)
    x_emb = jnp.dot(tok_oh, embed_ref[...], preferred_element_type=f32)          # (T, dim)

    # ---- torch: input_embeds[ids_cmp_mask] = input_resampler(image_embeds)[embeds_cmp_mask]
    # Reassociated: exact-select the matching image-query rows first (tiny K=SPAD
    # matmul), then apply the resampler weight on T rows only; bias re-added only
    # on matched rows.
    img = img_ref[...]                        # (SPAD, IMG_DIM) f32
    mcmp = ((dr_cmp == sr_cmp) & (dr_cmp > 0)).astype(f32)                        # (T, SPAD) exact 0/1
    sel = jnp.dot(mcmp, img, preferred_element_type=f32)                          # exact row select
    row_has_img = jnp.sum(mcmp, axis=-1, keepdims=True)                           # 1.0 on <img> slots
    x_img = jnp.dot(sel.astype(bf16), wir, preferred_element_type=f32) + row_has_img * b_ir
    x = x_emb * (1.0 - row_has_img) + x_img

    # ---- synthesized llm: 2-layer MLP, then fused [LM head | output_resampler]
    h = jnp.dot(x.astype(bf16), w1, preferred_element_type=f32) + b1
    h = jax.nn.gelu(h, approximate=True)      # TODO(synk): torch default GELU is exact erf
    last_hidden = jnp.dot(h.astype(bf16), w2, preferred_element_type=f32) + b2
    head = jnp.dot(last_hidden.astype(bf16), whead_ref[...],
                   preferred_element_type=f32) + b_head                            # (T, VOCAB+IMG_DIM)
    logits = head[:, :vocab]
    recon = head[:, vocab:]

    # ---- HF-style shifted cross-entropy (ignore -100); one-hot built in-kernel
    lbl_oh = ((vcol == sl) & (sl >= 0)).astype(f32)
    m = jnp.max(logits, axis=-1, keepdims=True)
    z = logits - m
    lse = jnp.log(jnp.sum(jnp.exp(z), axis=-1, keepdims=True))
    picked = jnp.sum(lbl_oh * z, axis=-1, keepdims=True)
    valid = jnp.sum(lbl_oh, axis=-1, keepdims=True)                               # 0 for ignored rows
    lm_sum = jnp.sum((lse - picked) * valid)
    lm_cnt = jnp.sum(valid)

    # ---- cosine reconstruction loss on gen rows (targets exact-selected in f32)
    ggen = ((dr_gen == sr_gen) & (dr_gen > 0)).astype(f32)                         # (T, SPAD)
    target = jnp.dot(ggen, img, preferred_element_type=f32)
    gen_valid = jnp.sum(ggen, axis=-1, keepdims=True)
    eps = 1e-12
    r_inv = jax.lax.rsqrt(jnp.maximum(jnp.sum(recon * recon, -1, keepdims=True), eps))
    t_inv = jax.lax.rsqrt(jnp.maximum(jnp.sum(target * target, -1, keepdims=True), eps))
    sim = jnp.sum((recon * r_inv) * (target * t_inv), axis=-1, keepdims=True)
    rec_sum = jnp.sum((1.0 - sim) * gen_valid)
    rec_cnt = jnp.sum(gen_valid)

    lm_loss = lm_sum / jnp.maximum(lm_cnt, 1.0)
    rec_loss = rec_sum / jnp.maximum(rec_cnt, 1.0)       # exactly 0.0 when no gen images
    total = lm_scale * lm_loss + rec_scale * rec_loss

    # lane-dense loss output: lanes 0,1,2 = total, lm, rec
    lane = jax.lax.broadcasted_iota(jnp.int32, (8, 128), 1)
    loss_ref[...] = (jnp.where(lane == 0, total, 0.0)
                     + jnp.where(lane == 1, lm_loss, 0.0)
                     + jnp.where(lane == 2, rec_loss, 0.0)).astype(f32)

    if recon_refs:                                       # only present when caller asked for recon
        recon_refs[0][...] = recon


# ----------------------------- parameters -----------------------------
def init_params(key):
    ks = jax.random.split(key, 6)
    s = 0.02
    f32, bf16 = jnp.float32, jnp.bfloat16
    embed = jax.random.normal(ks[0], (VOCAB, DIM), f32) * s
    w1 = jax.random.normal(ks[1], (DIM, DIM), f32) * s
    w2 = jax.random.normal(ks[2], (DIM, DIM), f32) * s
    w_out = jax.random.normal(ks[3], (DIM, VOCAB), f32) * s
    w_in_res = jax.random.normal(ks[4], (IMG_DIM, DIM), f32) * s
    w_out_res = jax.random.normal(ks[5], (DIM, IMG_DIM), f32) * s
    b_in_res = jnp.zeros((DIM,), f32)
    b1 = jnp.zeros((DIM,), f32)
    b2 = jnp.zeros((DIM,), f32)
    b_out = jnp.zeros((VOCAB,), f32)
    b_out_res = jnp.zeros((IMG_DIM,), f32)
    bias = jnp.zeros((4, HEADN), f32)
    bias = bias.at[0, :DIM].set(b_in_res).at[1, :DIM].set(b1).at[2, :DIM].set(b2)
    bias = bias.at[3, :].set(jnp.concatenate([b_out, b_out_res]))
    return {
        # embedding kept f32: one-hot matmul row-select is exact in f32
        "embed": embed,
        # weights stored bf16 once (no per-call convert) and packed to cut DMA count
        "w_stack": jnp.concatenate([w_in_res, w1, w2], axis=0).astype(bf16),   # (3*DIM, DIM)
        "w_head": jnp.concatenate([w_out, w_out_res], axis=1).astype(bf16),    # (DIM, HEADN)
        "bias": bias,                                                          # (4, HEADN)
    }


# ----------------------------- forward pass -----------------------------
def continuous_lvlm_forward(params, input_ids, attention_mask, labels,
                            image_embeds, embeds_gen_mask, embeds_cmp_mask,
                            ids_gen_mask, ids_cmp_mask,
                            return_recon_image_embeds=False,
                            lm_loss_scale=LM_LOSS_SCALE,
                            rec_loss_scale=REC_LOSS_SCALE):
    # TODO(synk): the real `llm` is a pretrained HF transformer; here it is a synthesized
    # MLP LM, so attention_mask is unused and causality only enters via label==-100.
    input_ids = jnp.asarray(input_ids, jnp.int32)
    labels = jnp.asarray(labels, jnp.int32)
    bz, sq = input_ids.shape
    T = bz * sq

    has_image = image_embeds is not None
    if not has_image:
        # torch draws randn here, but both image paths are disabled; zeros avoid PRNG/HBM work.
        image_embeds = jnp.zeros((bz, NUM_QUERIES, IMG_DIM), jnp.float32)
    image_embeds = jnp.asarray(image_embeds, jnp.float32)
    n_img, nq, _ = image_embeds.shape
    S = n_img * nq
    spad = max(8, ((S + 7) // 8) * 8)                    # shrink-wrap the image-row axis
    img_flat = image_embeds.reshape(S, IMG_DIM)
    img_pad = img_flat if spad == S else jnp.pad(img_flat, ((0, spad - S), (0, 0)))

    # Effective masks (has_image=False disables both image paths, matching torch).
    if has_image:
        cmp_img = jnp.asarray(embeds_cmp_mask).astype(bool)
        gen_img = jnp.asarray(embeds_gen_mask).astype(bool)
    else:
        cmp_img = jnp.zeros((n_img,), bool)
        gen_img = jnp.zeros((n_img,), bool)

    def masked_rank(v, sentinel):
        # k-th True position gets rank k (1-based); others get the sentinel.
        return jnp.where(v, jnp.cumsum(v.astype(jnp.int32)), jnp.int32(sentinel))

    src_cmp = jnp.zeros((spad,), bool).at[:S].set(jnp.repeat(cmp_img, nq))
    src_gen = jnp.zeros((spad,), bool).at[:S].set(jnp.repeat(gen_img, nq))
    dst_cmp = jnp.asarray(ids_cmp_mask).reshape(-1).astype(bool)
    dst_gen = jnp.asarray(ids_gen_mask).reshape(-1).astype(bool)

    # HF label shift (tiny XLA glue); the one-hot itself is built in-kernel.
    shift_labels = jnp.full((bz, sq), -100, jnp.int32).at[:, :-1].set(labels[:, 1:]).reshape(T)

    # Packed small-int metadata: one (T,4) per-token block, one (2,SPAD) per-source block.
    toks = jnp.stack([input_ids.reshape(T), shift_labels,
                      masked_rank(dst_cmp, 0), masked_rank(dst_gen, 0)], axis=1)
    srcs = jnp.stack([masked_rank(src_cmp, -1), masked_rank(src_gen, -1)], axis=0)

    kernel = functools.partial(_fused_lvlm_kernel,
                               lm_scale=float(lm_loss_scale),
                               rec_scale=float(rec_loss_scale))

    rep = lambda i: (0, 0)
    out_shape = [jax.ShapeDtypeStruct((8, 128), jnp.float32)]
    out_specs = [pl.BlockSpec((8, 128), rep)]
    if return_recon_image_embeds:                        # gate the recon HBM writeback
        out_shape.append(jax.ShapeDtypeStruct((T, IMG_DIM), jnp.float32))
        out_specs.append(pl.BlockSpec((T, IMG_DIM), rep))

    outs = pl.pallas_call(
        kernel,
        out_shape=tuple(out_shape),
        grid=(1,),                                       # single TC program; whole problem << VMEM
        in_specs=[
            pl.BlockSpec((T, 4), rep),                   # packed per-token ints
            pl.BlockSpec((2, spad), rep),                # packed per-source ranks
            pl.BlockSpec((spad, IMG_DIM), rep),          # image embeds (row-padded to mult. of 8)
            pl.BlockSpec((VOCAB, DIM), rep),             # embedding table (f32)
            pl.BlockSpec((3 * DIM, DIM), rep),           # [w_in_res; w1; w2] bf16
            pl.BlockSpec((DIM, HEADN), rep),             # [w_out | w_out_res] bf16
            pl.BlockSpec((4, HEADN), rep),               # packed biases f32
        ],
        out_specs=tuple(out_specs),
        compiler_params=pltpu.CompilerParams(dimension_semantics=("arbitrary",)),
    )(toks, srcs, img_pad, params["embed"], params["w_stack"],
      params["w_head"], params["bias"])

    loss_mat = outs[0]
    out = {"total_loss": loss_mat[0, 0],
           "lm_loss": loss_mat[0, 1],
           "rec_loss": loss_mat[0, 2]}

    if return_recon_image_embeds:
        # TODO(synk): the torch return has a data-dependent shape (boolean indexing); this
        # optional gather uses host mask values (masks are host arrays in this script).
        gen_np = np.asarray(embeds_gen_mask).astype(bool) if has_image else np.zeros((n_img,), bool)
        if has_image and int(gen_np.sum()) > 0:
            recon_all = outs[1]
            gen_pos = np.nonzero(np.asarray(ids_gen_mask).reshape(-1))[0]
            n_rec = int(gen_np.sum())
            out["recon_image_embeds"] = recon_all[gen_pos].reshape(n_rec, -1, IMG_DIM)
    return out


# ----------------------------- demo -----------------------------
if __name__ == "__main__":
    key = jax.random.PRNGKey(0)
    kp, kimg, kid, klab = jax.random.split(key, 4)
    params = init_params(kp)

    input_ids = jax.random.randint(kid, (BZ, SQ), 0, VOCAB, dtype=jnp.int32)
    labels_np = np.array(jax.random.randint(klab, (BZ, SQ), 0, VOCAB, dtype=jnp.int32))
    labels_np[:, :2] = -100                      # ignore prompt tokens
    labels = jnp.asarray(labels_np, jnp.int32)
    attention_mask = jnp.ones((BZ, SQ), jnp.int32)
    image_embeds = jax.random.normal(kimg, (BZ, NUM_QUERIES, IMG_DIM), jnp.float32)

    embeds_cmp_mask = np.array([True, True])     # both images used as input context
    embeds_gen_mask = np.array([True, False])    # first image is a generation target
    ids_cmp_mask = np.zeros((BZ, SQ), dtype=bool)
    ids_cmp_mask[:, 1:1 + NUM_QUERIES] = True    # NUM_QUERIES slots per cmp image
    ids_gen_mask = np.zeros((BZ, SQ), dtype=bool)
    ids_gen_mask[0, 10:10 + NUM_QUERIES] = True  # NUM_QUERIES slots for the gen image

    out = continuous_lvlm_forward(params, input_ids, attention_mask, labels,
                                  image_embeds, embeds_gen_mask, embeds_cmp_mask,
                                  ids_gen_mask, ids_cmp_mask,
                                  return_recon_image_embeds=True)
    jax.block_until_ready(out["total_loss"])
    print("KERNEL_OK")
</pallas_src>

<mosaic_0001>
module attributes {stable_mosaic.version = 11 : i64} {
  func.func @_fused_lvlm_kernel(%arg0: i32, %arg1: memref<32x4xi32, #tpu.memory_space<vmem>>, %arg2: memref<2x8xi32, #tpu.memory_space<vmem>>, %arg3: memref<8x128xf32, #tpu.memory_space<vmem>>, %arg4: memref<256x128xf32, #tpu.memory_space<vmem>>, %arg5: memref<384x128xbf16, #tpu.memory_space<vmem>>, %arg6: memref<128x384xbf16, #tpu.memory_space<vmem>>, %arg7: memref<4x384xf32, #tpu.memory_space<vmem>>, %arg8: memref<8x128xf32, #tpu.memory_space<vmem>>, %arg9: memref<32x128xf32, #tpu.memory_space<vmem>>) attributes {dimension_semantics = [#tpu.dimension_semantics<arbitrary>], iteration_bounds = array<i64: 1>, scalar_prefetch = 0 : i64, scratch_operands = 0 : i64, tpu.core_type = #tpu.core_type<tc>, window_params = [{pipeline_mode = #tpu.pipeline_mode<synchronous>, transform_indices = @transform_0, window_bounds = array<i64: 32, 4>}, {pipeline_mode = #tpu.pipeline_mode<synchronous>, transform_indices = @transform_1, window_bounds = array<i64: 2, 8>}, {pipeline_mode = #tpu.pipeline_mode<synchronous>, transform_indices = @transform_2, window_bounds = array<i64: 8, 128>}, {pipeline_mode = #tpu.pipeline_mode<synchronous>, transform_indices = @transform_3, window_bounds = array<i64: 256, 128>}, {pipeline_mode = #tpu.pipeline_mode<synchronous>, transform_indices = @transform_4, window_bounds = array<i64: 384, 128>}, {pipeline_mode = #tpu.pipeline_mode<synchronous>, transform_indices = @transform_5, window_bounds = array<i64: 128, 384>}, {pipeline_mode = #tpu.pipeline_mode<synchronous>, transform_indices = @transform_6, window_bounds = array<i64: 4, 384>}, {pipeline_mode = #tpu.pipeline_mode<synchronous>, transform_indices = @transform_7, window_bounds = array<i64: 8, 128>}, {pipeline_mode = #tpu.pipeline_mode<synchronous>, transform_indices = @transform_8, window_bounds = array<i64: 32, 128>}]} {
    %c0 = arith.constant 0 : index
    %c0_0 = arith.constant 0 : index
    %0 = vector.load %arg1[%c0, %c0_0] : memref<32x4xi32, #tpu.memory_space<vmem>>, vector<32x4xi32>
    %1 = vector.extract_strided_slice %0 {offsets = [0, 0], sizes = [32, 1], strides = [1, 1]} : vector<32x4xi32> to vector<32x1xi32>
    %2 = vector.extract_strided_slice %0 {offsets = [0, 1], sizes = [32, 1], strides = [1, 1]} : vector<32x4xi32> to vector<32x1xi32>
    %3 = vector.extract_strided_slice %0 {offsets = [0, 2], sizes = [32, 1], strides = [1, 1]} : vector<32x4xi32> to vector<32x1xi32>
    %4 = vector.extract_strided_slice %0 {offsets = [0, 3], sizes = [32, 1], strides = [1, 1]} : vector<32x4xi32> to vector<32x1xi32>
    %c0_1 = arith.constant 0 : index
    %c0_2 = arith.constant 0 : index
    %5 = vector.load %arg2[%c0_1, %c0_2] : memref<2x8xi32, #tpu.memory_space<vmem>>, vector<2x8xi32>
    %6 = vector.extract_strided_slice %5 {offsets = [0, 0], sizes = [1, 8], strides = [1, 1]} : vector<2x8xi32> to vector<1x8xi32>
    %7 = vector.extract_strided_slice %5 {offsets = [1, 0], sizes = [1, 8], strides = [1, 1]} : vector<2x8xi32> to vector<1x8xi32>
    %c0_3 = arith.constant 0 : index
    %c0_4 = arith.constant 0 : index
    %8 = vector.load %arg7[%c0_3, %c0_4] : memref<4x384xf32, #tpu.memory_space<vmem>>, vector<4x384xf32>
    %9 = vector.extract_strided_slice %8 {offsets = [0, 0], sizes = [1, 128], strides = [1, 1]} : vector<4x384xf32> to vector<1x128xf32>
    %10 = vector.extract_strided_slice %8 {offsets = [1, 0], sizes = [1, 128], strides = [1, 1]} : vector<4x384xf32> to vector<1x128xf32>
    %11 = vector.extract_strided_slice %8 {offsets = [2, 0], sizes = [1, 128], strides = [1, 1]} : vector<4x384xf32> to vector<1x128xf32>
    %12 = vector.extract_strided_slice %8 {offsets = [3, 0], sizes = [1, 384], strides = [1, 1]} : vector<4x384xf32> to vector<1x384xf32>
    %c0_5 = arith.constant 0 : index
    %c0_6 = arith.constant 0 : index
    %13 = vector.load %arg5[%c0_5, %c0_6] : memref<384x128xbf16, #tpu.memory_space<vmem>>, vector<128x128xbf16>
    %c128 = arith.constant 128 : index
    %c0_7 = arith.constant 0 : index
    %14 = vector.load %arg5[%c128, %c0_7] : memref<384x128xbf16, #tpu.memory_space<vmem>>, vector<128x128xbf16>
    %c256 = arith.constant 256 : index
    %c0_8 = arith.constant 0 : index
    %15 = vector.load %arg5[%c256, %c0_8] : memref<384x128xbf16, #tpu.memory_space<vmem>>, vector<128x128xbf16>
    %16 = tpu.iota {dimensions = array<i32: 1>} : vector<32x256xi32>
    %17 = vector.broadcast %1 : vector<32x1xi32> to vector<32x256xi32>
    %18 = arith.cmpi eq, %16, %17 : vector<32x256xi32>
    %19 = arith.extui %18 : vector<32x256xi1> to vector<32x256xi32>
    %20 = arith.sitofp %19 : vector<32x256xi32> to vector<32x256xf32>
    %c0_9 = arith.constant 0 : index
    %c0_10 = arith.constant 0 : index
    %21 = vector.load %arg4[%c0_9, %c0_10] : memref<256x128xf32, #tpu.memory_space<vmem>>, vector<256x128xf32>
    %cst = arith.constant dense<0.000000e+00> : vector<32x128xf32>
    %22 = tpu.matmul %20, %21, %cst {dimension_numbers = #tpu.dot_dimension_numbers<[1], [0], [0], [1], [0, 0, 1, 1], [], []>} : vector<32x256xf32>, vector<256x128xf32>, vector<32x128xf32> -> vector<32x128xf32>
    %c0_11 = arith.constant 0 : index
    %c0_12 = arith.constant 0 : index
    %23 = vector.load %arg3[%c0_11, %c0_12] : memref<8x128xf32, #tpu.memory_space<vmem>>, vector<8x128xf32>
    %24 = vector.broadcast %3 : vector<32x1xi32> to vector<32x8xi32>
    %25 = vector.broadcast %6 : vector<1x8xi32> to vector<32x8xi32>
    %26 = arith.cmpi eq, %24, %25 : vector<32x8xi32>
    %c0_i32 = arith.constant 0 : i32
    %27 = vector.broadcast %c0_i32 : i32 to vector<32x1xi32>
    %28 = arith.cmpi sgt, %3, %27 : vector<32x1xi32>
    %29 = vector.broadcast %28 : vector<32x1xi1> to vector<32x8xi1>
    %30 = arith.andi %26, %29 : vector<32x8xi1>
    %31 = arith.extui %30 : vector<32x8xi1> to vector<32x8xi32>
    %32 = arith.sitofp %31 : vector<32x8xi32> to vector<32x8xf32>
    %cst_13 = arith.constant dense<0.000000e+00> : vector<32x128xf32>
    %33 = tpu.matmul %32, %23, %cst_13 {dimension_numbers = #tpu.dot_dimension_numbers<[1], [0], [0], [1], [0, 0, 1, 1], [], []>} : vector<32x8xf32>, vector<8x128xf32>, vector<32x128xf32> -> vector<32x128xf32>
    %cst_14 = arith.constant dense<0.000000e+00> : vector<32xf32>
    %34 = vector.multi_reduction <add>, %32, %cst_14 [1] : vector<32x8xf32> to vector<32xf32>
    %35 = vector.shape_cast %34 : vector<32xf32> to vector<32x1xf32>
    %36 = arith.truncf %33 : vector<32x128xf32> to vector<32x128xbf16>
    %cst_15 = arith.constant dense<0.000000e+00> : vector<32x128xf32>
    %37 = tpu.matmul %36, %13, %cst_15 {dimension_numbers = #tpu.dot_dimension_numbers<[1], [0], [0], [1], [0, 0, 1, 1], [], []>} : vector<32x128xbf16>, vector<128x128xbf16>, vector<32x128xf32> -> vector<32x128xf32>
    %38 = vector.broadcast %35 : vector<32x1xf32> to vector<32x128xf32>
    %39 = vector.broadcast %9 : vector<1x128xf32> to vector<32x128xf32>
    %40 = arith.mulf %38, %39 : vector<32x128xf32>
    %41 = arith.addf %37, %40 : vector<32x128xf32>
    %cst_16 = arith.constant 1.000000e+00 : f32
    %42 = vector.broadcast %cst_16 : f32 to vector<32x1xf32>
    %43 = arith.subf %42, %35 : vector<32x1xf32>
    %44 = vector.broadcast %43 : vector<32x1xf32> to vector<32x128xf32>
    %45 = arith.mulf %22, %44 : vector<32x128xf32>
    %46 = arith.addf %45, %41 : vector<32x128xf32>
    %47 = arith.truncf %46 : vector<32x128xf32> to vector<32x128xbf16>
    %cst_17 = arith.constant dense<0.000000e+00> : vector<32x128xf32>
    %48 = tpu.matmul %47, %14, %cst_17 {dimension_numbers = #tpu.dot_dimension_numbers<[1], [0], [0], [1], [0, 0, 1, 1], [], []>} : vector<32x128xbf16>, vector<128x128xbf16>, vector<32x128xf32> -> vector<32x128xf32>
    %49 = vector.broadcast %10 : vector<1x128xf32> to vector<32x128xf32>
    %50 = arith.addf %48, %49 : vector<32x128xf32>
    %51 = arith.mulf %50, %50 : vector<32x128xf32>
    %52 = arith.mulf %50, %51 : vector<32x128xf32>
    %cst_18 = arith.constant 4.471500e-02 : f32
    %53 = vector.broadcast %cst_18 : f32 to vector<32x128xf32>
    %54 = arith.mulf %53, %52 : vector<32x128xf32>
    %55 = arith.addf %50, %54 : vector<32x128xf32>
    %cst_19 = arith.constant 0.797884583 : f32
    %56 = vector.broadcast %cst_19 : f32 to vector<32x128xf32>
    %57 = arith.mulf %56, %55 : vector<32x128xf32>
    %58 = math.tanh %57 : vector<32x128xf32>
    %cst_20 = arith.constant 1.000000e+00 : f32
    %59 = vector.broadcast %cst_20 : f32 to vector<32x128xf32>
    %60 = arith.addf %59, %58 : vector<32x128xf32>
    %cst_21 = arith.constant 5.000000e-01 : f32
    %61 = vector.broadcast %cst_21 : f32 to vector<32x128xf32>
    %62 = arith.mulf %61, %60 : vector<32x128xf32>
    %63 = arith.mulf %50, %62 : vector<32x128xf32>
    %64 = arith.truncf %63 : vector<32x128xf32> to vector<32x128xbf16>
    %cst_22 = arith.constant dense<0.000000e+00> : vector<32x128xf32>
    %65 = tpu.matmul %64, %15, %cst_22 {dimension_numbers = #tpu.dot_dimension_numbers<[1], [0], [0], [1], [0, 0, 1, 1], [], []>} : vector<32x128xbf16>, vector<128x128xbf16>, vector<32x128xf32> -> vector<32x128xf32>
    %66 = vector.broadcast %11 : vector<1x128xf32> to vector<32x128xf32>
    %67 = arith.addf %65, %66 : vector<32x128xf32>
    %68 = arith.truncf %67 : vector<32x128xf32> to vector<32x128xbf16>
    %c0_23 = arith.constant 0 : index
    %c0_24 = arith.constant 0 : index
    %69 = vector.load %arg6[%c0_23, %c0_24] : memref<128x384xbf16, #tpu.memory_space<vmem>>, vector<128x384xbf16>
    %cst_25 = arith.constant dense<0.000000e+00> : vector<32x384xf32>
    %70 = tpu.matmul %68, %69, %cst_25 {dimension_numbers = #tpu.dot_dimension_numbers<[1], [0], [0], [1], [0, 0, 1, 1], [], []>} : vector<32x128xbf16>, vector<128x384xbf16>, vector<32x384xf32> -> vector<32x384xf32>
    %71 = vector.broadcast %12 : vector<1x384xf32> to vector<32x384xf32>
    %72 = arith.addf %70, %71 : vector<32x384xf32>
    %73 = vector.extract_strided_slice %72 {offsets = [0, 0], sizes = [32, 256], strides = [1, 1]} : vector<32x384xf32> to vector<32x256xf32>
    %74 = vector.extract_strided_slice %72 {offsets = [0, 256], sizes = [32, 128], strides = [1, 1]} : vector<32x384xf32> to vector<32x128xf32>
    %75 = vector.broadcast %2 : vector<32x1xi32> to vector<32x256xi32>
    %76 = arith.cmpi eq, %16, %75 : vector<32x256xi32>
    %c0_i32_26 = arith.constant 0 : i32
    %77 = vector.broadcast %c0_i32_26 : i32 to vector<32x1xi32>
    %78 = arith.cmpi sge, %2, %77 : vector<32x1xi32>
    %79 = vector.broadcast %78 : vector<32x1xi1> to vector<32x256xi1>
    %80 = arith.andi %76, %79 : vector<32x256xi1>
    %81 = arith.extui %80 : vector<32x256xi1> to vector<32x256xi32>
    %82 = arith.sitofp %81 : vector<32x256xi32> to vector<32x256xf32>
    %cst_27 = arith.constant dense<0xFF800000> : vector<32xf32>
    %83 = vector.multi_reduction <maximumf>, %73, %cst_27 [1] : vector<32x256xf32> to vector<32xf32>
    %84 = vector.shape_cast %83 : vector<32xf32> to vector<32x1xf32>
    %85 = vector.broadcast %84 : vector<32x1xf32> to vector<32x256xf32>
    %86 = arith.subf %73, %85 : vector<32x256xf32>
    %87 = math.exp %86 : vector<32x256xf32>
    %cst_28 = arith.constant dense<0.000000e+00> : vector<32xf32>
    %88 = vector.multi_reduction <add>, %87, %cst_28 [1] : vector<32x256xf32> to vector<32xf32>
    %89 = vector.shape_cast %88 : vector<32xf32> to vector<32x1xf32>
    %90 = math.log %89 : vector<32x1xf32>
    %91 = arith.mulf %82, %86 : vector<32x256xf32>
    %cst_29 = arith.constant dense<0.000000e+00> : vector<32xf32>
    %92 = vector.multi_reduction <add>, %91, %cst_29 [1] : vector<32x256xf32> to vector<32xf32>
    %93 = vector.shape_cast %92 : vector<32xf32> to vector<32x1xf32>
    %cst_30 = arith.constant dense<0.000000e+00> : vector<32xf32>
    %94 = vector.multi_reduction <add>, %82, %cst_30 [1] : vector<32x256xf32> to vector<32xf32>
    %95 = vector.shape_cast %94 : vector<32xf32> to vector<32x1xf32>
    %96 = arith.subf %90, %93 : vector<32x1xf32>
    %97 = arith.mulf %96, %95 : vector<32x1xf32>
    %98 = vector.shape_cast %97 : vector<32x1xf32> to vector<1x32x1xf32>
    %cst_31 = arith.constant dense<0.000000e+00> : vector<1xf32>
    %99 = vector.multi_reduction <add>, %98, %cst_31 [1, 2] : vector<1x32x1xf32> to vector<1xf32>
    %100 = vector.shape_cast %99 : vector<1xf32> to vector<1x1x1xf32>
    %101 = vector.extract %100[0, 0, 0] : f32 from vector<1x1x1xf32>
    %102 = vector.shape_cast %95 : vector<32x1xf32> to vector<1x32x1xf32>
    %cst_32 = arith.constant dense<0.000000e+00> : vector<1xf32>
    %103 = vector.multi_reduction <add>, %102, %cst_32 [1, 2] : vector<1x32x1xf32> to vector<1xf32>
    %104 = vector.shape_cast %103 : vector<1xf32> to vector<1x1x1xf32>
    %105 = vector.extract %104[0, 0, 0] : f32 from vector<1x1x1xf32>
    %106 = vector.broadcast %4 : vector<32x1xi32> to vector<32x8xi32>
    %107 = vector.broadcast %7 : vector<1x8xi32> to vector<32x8xi32>
    %108 = arith.cmpi eq, %106, %107 : vector<32x8xi32>
    %c0_i32_33 = arith.constant 0 : i32
    %109 = vector.broadcast %c0_i32_33 : i32 to vector<32x1xi32>
    %110 = arith.cmpi sgt, %4, %109 : vector<32x1xi32>
    %111 = vector.broadcast %110 : vector<32x1xi1> to vector<32x8xi1>
    %112 = arith.andi %108, %111 : vector<32x8xi1>
    %113 = arith.extui %112 : vector<32x8xi1> to vector<32x8xi32>
    %114 = arith.sitofp %113 : vector<32x8xi32> to vector<32x8xf32>
    %cst_34 = arith.constant dense<0.000000e+00> : vector<32x128xf32>
    %115 = tpu.matmul %114, %23, %cst_34 {dimension_numbers = #tpu.dot_dimension_numbers<[1], [0], [0], [1], [0, 0, 1, 1], [], []>} : vector<32x8xf32>, vector<8x128xf32>, vector<32x128xf32> -> vector<32x128xf32>
    %cst_35 = arith.constant dense<0.000000e+00> : vector<32xf32>
    %116 = vector.multi_reduction <add>, %114, %cst_35 [1] : vector<32x8xf32> to vector<32xf32>
    %117 = vector.shape_cast %116 : vector<32xf32> to vector<32x1xf32>
    %118 = arith.mulf %74, %74 : vector<32x128xf32>
    %cst_36 = arith.constant dense<0.000000e+00> : vector<32xf32>
    %119 = vector.multi_reduction <add>, %118, %cst_36 [1] : vector<32x128xf32> to vector<32xf32>
    %120 = vector.shape_cast %119 : vector<32xf32> to vector<32x1xf32>
    %cst_37 = arith.constant 9.99999996E-13 : f32
    %121 = vector.broadcast %cst_37 : f32 to vector<32x1xf32>
    %122 = arith.maximumf %120, %121 : vector<32x1xf32>
    %123 = math.rsqrt %122 : vector<32x1xf32>
    %124 = arith.mulf %115, %115 : vector<32x128xf32>
    %cst_38 = arith.constant dense<0.000000e+00> : vector<32xf32>
    %125 = vector.multi_reduction <add>, %124, %cst_38 [1] : vector<32x128xf32> to vector<32xf32>
    %126 = vector.shape_cast %125 : vector<32xf32> to vector<32x1xf32>
    %cst_39 = arith.constant 9.99999996E-13 : f32
    %127 = vector.broadcast %cst_39 : f32 to vector<32x1xf32>
    %128 = arith.maximumf %126, %127 : vector<32x1xf32>
    %129 = math.rsqrt %128 : vector<32x1xf32>
    %130 = vector.broadcast %123 : vector<32x1xf32> to vector<32x128xf32>
    %131 = arith.mulf %74, %130 : vector<32x128xf32>
    %132 = vector.broadcast %129 : vector<32x1xf32> to vector<32x128xf32>
    %133 = arith.mulf %115, %132 : vector<32x128xf32>
    %134 = arith.mulf %131, %133 : vector<32x128xf32>
    %cst_40 = arith.constant dense<0.000000e+00> : vector<32xf32>
    %135 = vector.multi_reduction <add>, %134, %cst_40 [1] : vector<32x128xf32> to vector<32xf32>
    %136 = vector.shape_cast %135 : vector<32xf32> to vector<32x1xf32>
    %cst_41 = arith.constant 1.000000e+00 : f32
    %137 = vector.broadcast %cst_41 : f32 to vector<32x1xf32>
    %138 = arith.subf %137, %136 : vector<32x1xf32>
    %139 = arith.mulf %138, %117 : vector<32x1xf32>
    %140 = vector.shape_cast %139 : vector<32x1xf32> to vector<1x32x1xf32>
    %cst_42 = arith.constant dense<0.000000e+00> : vector<1xf32>
    %141 = vector.multi_reduction <add>, %140, %cst_42 [1, 2] : vector<1x32x1xf32> to vector<1xf32>
    %142 = vector.shape_cast %141 : vector<1xf32> to vector<1x1x1xf32>
    %143 = vector.extract %142[0, 0, 0] : f32 from vector<1x1x1xf32>
    %144 = vector.shape_cast %117 : vector<32x1xf32> to vector<1x32x1xf32>
    %cst_43 = arith.constant dense<0.000000e+00> : vector<1xf32>
    %145 = vector.multi_reduction <add>, %144, %cst_43 [1, 2] : vector<1x32x1xf32> to vector<1xf32>
    %146 = vector.shape_cast %145 : vector<1xf32> to vector<1x1x1xf32>
    %147 = vector.extract %146[0, 0, 0] : f32 from vector<1x1x1xf32>
    %cst_44 = arith.constant 1.000000e+00 : f32
    %148 = arith.maximumf %105, %cst_44 : f32
    %149 = arith.divf %101, %148 : f32
    %cst_45 = arith.constant 1.000000e+00 : f32
    %150 = arith.maximumf %147, %cst_45 : f32
    %151 = arith.divf %143, %150 : f32
    %cst_46 = arith.constant 1.000000e+00 : f32
    %152 = arith.mulf %cst_46, %149 : f32
    %cst_47 = arith.constant 1.000000e+00 : f32
    %153 = arith.mulf %cst_47, %151 : f32
    %154 = arith.addf %152, %153 : f32
    %155 = tpu.iota {dimensions = array<i32: 1>} : vector<8x128xi32>
    %c0_i32_48 = arith.constant 0 : i32
    %156 = vector.broadcast %c0_i32_48 : i32 to vector<8x128xi32>
    %157 = arith.cmpi eq, %155, %156 : vector<8x128xi32>
    %cst_49 = arith.constant 0.000000e+00 : f32
    %158 = vector.broadcast %154 : f32 to vector<8x128xf32>
    %159 = vector.broadcast %cst_49 : f32 to vector<8x128xf32>
    %160 = arith.select %157, %158, %159 : vector<8x128xi1>, vector<8x128xf32>
    %c1_i32 = arith.constant 1 : i32
    %161 = vector.broadcast %c1_i32 : i32 to vector<8x128xi32>
    %162 = arith.cmpi eq, %155, %161 : vector<8x128xi32>
    %cst_50 = arith.constant 0.000000e+00 : f32
    %163 = vector.broadcast %149 : f32 to vector<8x128xf32>
    %164 = vector.broadcast %cst_50 : f32 to vector<8x128xf32>
    %165 = arith.select %162, %163, %164 : vector<8x128xi1>, vector<8x128xf32>
    %166 = arith.addf %160, %165 : vector<8x128xf32>
    %c2_i32 = arith.constant 2 : i32
    %167 = vector.broadcast %c2_i32 : i32 to vector<8x128xi32>
    %168 = arith.cmpi eq, %155, %167 : vector<8x128xi32>
    %cst_51 = arith.constant 0.000000e+00 : f32
    %169 = vector.broadcast %151 : f32 to vector<8x128xf32>
    %170 = vector.broadcast %cst_51 : f32 to vector<8x128xf32>
    %171 = arith.select %168, %169, %170 : vector<8x128xi1>, vector<8x128xf32>
    %172 = arith.addf %166, %171 : vector<8x128xf32>
    %c0_52 = arith.constant 0 : index
    %c0_53 = arith.constant 0 : index
    %173 = vector.load %arg8[%c0_52, %c0_53] : memref<8x128xf32, #tpu.memory_space<vmem>>, vector<8x128xf32>
    tpu.vector_store %arg8[%c0_52, %c0_53], %172 {strides = array<i32>} : memref<8x128xf32, #tpu.memory_space<vmem>>, vector<8x128xf32>,
    %c0_54 = arith.constant 0 : index
    %c0_55 = arith.constant 0 : index
    %174 = vector.load %arg9[%c0_54, %c0_55] : memref<32x128xf32, #tpu.memory_space<vmem>>, vector<32x128xf32>
    tpu.vector_store %arg9[%c0_54, %c0_55], %74 {strides = array<i32>} : memref<32x128xf32, #tpu.memory_space<vmem>>, vector<32x128xf32>,
    return
  }
  func.func @transform_0(%arg0: i32) -> (i32, i32) {
    %c0_i32 = arith.constant 0 : i32
    %c0_i32_0 = arith.constant 0 : i32
    %c0_i32_1 = arith.constant 0 : i32
    return %c0_i32, %c0_i32_0 : i32, i32
  }
  func.func @transform_1(%arg0: i32) -> (i32, i32) {
    %c0_i32 = arith.constant 0 : i32
    %c0_i32_0 = arith.constant 0 : i32
    %c0_i32_1 = arith.constant 0 : i32
    return %c0_i32, %c0_i32_0 : i32, i32
  }
  func.func @transform_2(%arg0: i32) -> (i32, i32) {
    %c0_i32 = arith.constant 0 : i32
    %c0_i32_0 = arith.constant 0 : i32
    %c0_i32_1 = arith.constant 0 : i32
    return %c0_i32, %c0_i32_0 : i32, i32
  }
  func.func @transform_3(%arg0: i32) -> (i32, i32) {
    %c0_i32 = arith.constant 0 : i32
    %c0_i32_0 = arith.constant 0 : i32
    %c0_i32_1 = arith.constant 0 : i32
    return %c0_i32, %c0_i32_0 : i32, i32
  }
  func.func @transform_4(%arg0: i32) -> (i32, i32) {
    %c0_i32 = arith.constant 0 : i32
    %c0_i32_0 = arith.constant 0 : i32
    %c0_i32_1 = arith.constant 0 : i32
    return %c0_i32, %c0_i32_0 : i32, i32
  }
  func.func @transform_5(%arg0: i32) -> (i32, i32) {
    %c0_i32 = arith.constant 0 : i32
    %c0_i32_0 = arith.constant 0 : i32
    %c0_i32_1 = arith.constant 0 : i32
    return %c0_i32, %c0_i32_0 : i32, i32
  }
  func.func @transform_6(%arg0: i32) -> (i32, i32) {
    %c0_i32 = arith.constant 0 : i32
    %c0_i32_0 = arith.constant 0 : i32
    %c0_i32_1 = arith.constant 0 : i32
    return %c0_i32, %c0_i32_0 : i32, i32
  }
  func.func @transform_7(%arg0: i32) -> (i32, i32) {
    %c0_i32 = arith.constant 0 : i32
    %c0_i32_0 = arith.constant 0 : i32
    %c0_i32_1 = arith.constant 0 : i32
    return %c0_i32, %c0_i32_0 : i32, i32
  }
  func.func @transform_8(%arg0: i32) -> (i32, i32) {
    %c0_i32 = arith.constant 0 : i32
    %c0_i32_0 = arith.constant 0 : i32
    %c0_i32_1 = arith.constant 0 : i32
    return %c0_i32, %c0_i32_0 : i32, i32
  }
}

</mosaic_0001>

<llo_original>
// kernel: tpu_custom_call.1
$region0: #{tpu_custom_call.1}
  #allocation0 [shape = 'u32[]', space=smem, size = 0x4, offset = 0x4, fixed_abs, tag = 'smem constant byte address 0x4 - core index']
  #allocation1 [shape = 'u32[72,128]{1,0:T(1,128)}', space=vmem, size = 0x9000, scoped, tag = 'internal scratch']
  %s0 = inlined_call_operand.vmem [shape: s32[32,4], index: 0, kind: input, shape index: {}]
  %s1 = inlined_call_operand.vmem [shape: s32[2,8], index: 1, kind: input, shape index: {}]
  %s2 = inlined_call_operand.vmem [shape: f32[8,128], index: 2, kind: input, shape index: {}]
  %s3 = inlined_call_operand.hbm [shape: f32[256,128], index: 3, kind: input, shape index: {}]
  %s4 = inlined_call_operand.hbm [shape: bf16[384,128], index: 4, kind: input, shape index: {}]
  %s5 = inlined_call_operand.hbm [shape: bf16[128,384], index: 5, kind: input, shape index: {}]
  %s6 = inlined_call_operand.vmem [shape: f32[4,384], index: 6, kind: input, shape index: {}]
  %s7 = inlined_call_operand.hbm [shape: f32[8,128], index: 7, kind: output, shape index: {0}]
  %s8 = inlined_call_operand.hbm [shape: f32[32,128], index: 8, kind: output, shape index: {1}]
  %9 = xla_tuple %s7, %s8
  %s10 = sld [smem:[#allocation0]]
  $region58: #{tpu_custom_call.1} parent=0
    _
  %s12 = ssub.s32 1, %s10
  %s13 = scalar_select 0, %s12, %s10
  $region1: #{tpu_custom_call.1} parent=0
    #allocation2 [shape = 'u8[131072]{0}', space=vmem, size = 0x20000, scoped, tag = 'input window, operand 3, single buffered']
    #allocation3 [shape = 's32[1]{0}', space=sflag, size = 0x4, scoped, tag = 'scoped memory for tpu_custom_call.1']
    #allocation4 [shape = 's32[1]{0}', space=sflag, size = 0x4, scoped, tag = 'scoped memory for tpu_custom_call.1']
    #allocation5 [shape = 'u8[98304]{0}', space=vmem, size = 0x18000, scoped, tag = 'input window, operand 4, single buffered']
    #allocation6 [shape = 's32[1]{0}', space=sflag, size = 0x4, scoped, tag = 'scoped memory for tpu_custom_call.1']
    #allocation7 [shape = 'u8[98304]{0}', space=vmem, size = 0x18000, scoped, tag = 'input window, operand 5, single buffered']
    #allocation8 [shape = 'u8[4096]{0}', space=vmem, size = 0x1000, scoped, tag = 'output window, operand 0, single buffered']
    #allocation9 [shape = 'u8[16384]{0}', space=vmem, size = 0x4000, scoped, tag = 'output window, operand 1, single buffered']
    #allocation10 [shape = 's32[1]{0}', space=sflag, size = 0x4, scoped, tag = 'scoped memory for tpu_custom_call.1']
    %14 = vsyncpa [#allocation3], 0
    %15 = vsyncpa [#allocation6], 0
    %16 = vsyncpa [#allocation4], 0
    %17 = vsyncpa [#allocation10], 0
    // Predicated region
    $region2: #{tpu_custom_call.1} parent=1 // pred_check
      _
    $region3: #{tpu_custom_call.1} parent=1 // pred_check_branch
      %19 = sbr.rel (0) target = $region5
    $region4: #{tpu_custom_call.1} parent=1 // pred_region
      _
    $region5: #{tpu_custom_call.1} parent=1 // pred_fallthru
      _
    // Predicated region
    $region6: #{tpu_custom_call.1} parent=1 // pred_check
      _
    $region7: #{tpu_custom_call.1} parent=1 // pred_check_branch
      %21 = sbr.rel (0) target = $region9
    $region8: #{tpu_custom_call.1} parent=1 // pred_region
      _
    $region9: #{tpu_custom_call.1} parent=1 // pred_fallthru
      _
    // Predicated region
    $region10: #{tpu_custom_call.1} parent=1 // pred_check
      _
    $region11: #{tpu_custom_call.1} parent=1 // pred_check_branch
      %23 = sbr.rel (0) target = $region13
    $region12: #{tpu_custom_call.1} parent=1 // pred_region
      _
    $region13: #{tpu_custom_call.1} parent=1 // pred_fallthru
      _
    // Predicated region
    $region14: #{tpu_custom_call.1} parent=1 // pred_check
      _
    $region15: #{tpu_custom_call.1} parent=1 // pred_check_branch
      %25 = sbr.rel (0) target = $region17
    $region16: #{tpu_custom_call.1} parent=1 // pred_region
      %27 = vsyncadd [#allocation3], 0
      %s28 = sshll.u32 %s3, 4
      %s29 = int_to_ptr.hbm [resolvable:$true] %s28
      %s30 = sshll.u32 [#allocation2], 4
      %s31 = int_to_ptr.vmem [resolvable:$true] %s30
      %36 = dma.hbm_to_vmem [thread:$0]  %s29, 4096, %s31, [#allocation3], 128, 128, 8
    $region17: #{tpu_custom_call.1} parent=1 // pred_fallthru
      _
    // Predicated region
    $region18: #{tpu_custom_call.1} parent=1 // pred_check
      _
    $region19: #{tpu_custom_call.1} parent=1 // pred_check_branch
      %38 = sbr.rel (0) target = $region21
    $region20: #{tpu_custom_call.1} parent=1 // pred_region
      %40 = vsyncadd [#allocation6], 0
      %s41 = sshll.u32 %s4, 4
      %s42 = int_to_ptr.hbm [resolvable:$true] %s41
      %s43 = sshll.u32 [#allocation5], 4
      %s44 = int_to_ptr.vmem [resolvable:$true] %s43
      %49 = dma.hbm_to_vmem [thread:$0]  %s42, 3072, %s44, [#allocation6], 64, 64, 4
    $region21: #{tpu_custom_call.1} parent=1 // pred_fallthru
      _
    // Predicated region
    $region22: #{tpu_custom_call.1} parent=1 // pred_check
      _
    $region23: #{tpu_custom_call.1} parent=1 // pred_check_branch
      %51 = sbr.rel (0) target = $region25
    $region24: #{tpu_custom_call.1} parent=1 // pred_region
      %53 = vsyncadd [#allocation6], 0
      %s54 = sshll.u32 %s5, 4
      %s55 = int_to_ptr.hbm [resolvable:$true] %s54
      %s56 = sshll.u32 [#allocation7], 4
      %s57 = int_to_ptr.vmem [resolvable:$true] %s56
      %62 = dma.hbm_to_vmem [thread:$0]  %s55, 3072, %s57, [#allocation6], 192, 192, 12
    $region25: #{tpu_custom_call.1} parent=1 // pred_fallthru
      _
    // Predicated region
    $region26: #{tpu_custom_call.1} parent=1 // pred_check
      _
    $region27: #{tpu_custom_call.1} parent=1 // pred_check_branch
      %64 = sbr.rel (0) target = $region29
    $region28: #{tpu_custom_call.1} parent=1 // pred_region
      _
    $region29: #{tpu_custom_call.1} parent=1 // pred_fallthru
      _
    // Predicated region
    $region30: #{tpu_custom_call.1} parent=1 // pred_check
      _
    $region31: #{tpu_custom_call.1} parent=1 // pred_check_branch
      %66 = sbr.rel (0) target = $region33
    $region32: #{tpu_custom_call.1} parent=1 // pred_region
      %68 = dma.done [#allocation3], 4096
    $region33: #{tpu_custom_call.1} parent=1 // pred_fallthru
      _
    // Predicated region
    $region34: #{tpu_custom_call.1} parent=1 // pred_check
      _
    $region35: #{tpu_custom_call.1} parent=1 // pred_check_branch
      %70 = sbr.rel (0) target = $region37
    $region36: #{tpu_custom_call.1} parent=1 // pred_region
      %72 = dma.done [#allocation6], 3072
    $region37: #{tpu_custom_call.1} parent=1 // pred_fallthru
      _
    // Predicated region
    $region38: #{tpu_custom_call.1} parent=1 // pred_check
      _
    $region39: #{tpu_custom_call.1} parent=1 // pred_check_branch
      %74 = sbr.rel (0) target = $region41
    $region40: #{tpu_custom_call.1} parent=1 // pred_region
      %76 = dma.done [#allocation6], 3072
    $region41: #{tpu_custom_call.1} parent=1 // pred_fallthru
      _
    %v77 = vld [vmem:[%s0] sm:$0xff]
    %v78 = vld [vmem:[%s0 + $0x8] sm:$0xff]
    %v79 = vld [vmem:[%s0 + $0x10] sm:$0xff]
    %v80 = vld [vmem:[%s0 + $0x18] sm:$0xff]
    %v81 = vld [vmem:[%s1] sm:$0x3]
    %v82 = vld [vmem:[%s6] sm:$0xff]
    %v83 = vld [vmem:[%s6 + $0x8] sm:$0xf]
    %v84 = vld [vmem:[#allocation5] sm:$0xf]
    %v85 = vld [vmem:[#allocation5 + $0x4] sm:$0xf]
    %v86 = vld [vmem:[#allocation5 + $0x8] sm:$0xf]
    %v87 = vld [vmem:[#allocation5 + $0xc] sm:$0xf]
    %v88 = vld [vmem:[#allocation5 + $0x10] sm:$0xf]
    %v89 = vld [vmem:[#allocation5 + $0x14] sm:$0xf]
    %v90 = vld [vmem:[#allocation5 + $0x18] sm:$0xf]
    %v91 = vld [vmem:[#allocation5 + $0x1c] sm:$0xf]
    %v92 = vld [vmem:[#allocation5 + $0x20] sm:$0xf]
    %v93 = vld [vmem:[#allocation5 + $0x24] sm:$0xf]
    %v94 = vld [vmem:[#allocation5 + $0x28] sm:$0xf]
    %v95 = vld [vmem:[#allocation5 + $0x2c] sm:$0xf]
    %v96 = vld [vmem:[#allocation5 + $0x30] sm:$0xf]
    %v97 = vld [vmem:[#allocation5 + $0x34] sm:$0xf]
    %v98 = vld [vmem:[#allocation5 + $0x38] sm:$0xf]
    %v99 = vld [vmem:[#allocation5 + $0x3c] sm:$0xf]
    %v100 = vld [vmem:[#allocation5 + $0x40] sm:$0xf]
    %v101 = vld [vmem:[#allocation5 + $0x44] sm:$0xf]
    %v102 = vld [vmem:[#allocation5 + $0x48] sm:$0xf]
    %v103 = vld [vmem:[#allocation5 + $0x4c] sm:$0xf]
    %v104 = vld [vmem:[#allocation5 + $0x50] sm:$0xf]
    %v105 = vld [vmem:[#allocation5 + $0x54] sm:$0xf]
    %v106 = vld [vmem:[#allocation5 + $0x58] sm:$0xf]
    %v107 = vld [vmem:[#allocation5 + $0x5c] sm:$0xf]
    %v108 = vld [vmem:[#allocation5 + $0x60] sm:$0xf]
    %v109 = vld [vmem:[#allocation5 + $0x64] sm:$0xf]
    %v110 = vld [vmem:[#allocation5 + $0x68] sm:$0xf]
    %v111 = vld [vmem:[#allocation5 + $0x6c] sm:$0xf]
    %v112 = vld [vmem:[#allocation5 + $0x70] sm:$0xf]
    %v113 = vld [vmem:[#allocation5 + $0x74] sm:$0xf]
    %v114 = vld [vmem:[#allocation5 + $0x78] sm:$0xf]
    %v115 = vld [vmem:[#allocation5 + $0x7c] sm:$0xf]
    %v116 = vld [vmem:[#allocation5 + $0x80] sm:$0xf]
    %v117 = vld [vmem:[#allocation5 + $0x84] sm:$0xf]
    %v118 = vld [vmem:[#allocation5 + $0x88] sm:$0xf]
    %v119 = vld [vmem:[#allocation5 + $0x8c] sm:$0xf]
    %v120 = vld [vmem:[#allocation5 + $0x90] sm:$0xf]
    %v121 = vld [vmem:[#allocation5 + $0x94] sm:$0xf]
    %v122 = vld [vmem:[#allocation5 + $0x98] sm:$0xf]
    %v123 = vld [vmem:[#allocation5 + $0x9c] sm:$0xf]
    %v124 = vld [vmem:[#allocation5 + $0xa0] sm:$0xf]
    %v125 = vld [vmem:[#allocation5 + $0xa4] sm:$0xf]
    %v126 = vld [vmem:[#allocation5 + $0xa8] sm:$0xf]
    %v127 = vld [vmem:[#allocation5 + $0xac] sm:$0xf]
    %v128 = vld [vmem:[#allocation5 + $0xb0] sm:$0xf]
    %v129 = vld [vmem:[#allocation5 + $0xb4] sm:$0xf]
    %v130 = vld [vmem:[#allocation5 + $0xb8] sm:$0xf]
    %v131 = vld [vmem:[#allocation5 + $0xbc] sm:$0xf]
    %v132 = vlaneseq
    %v133 = vand.u32 %v132, 127
    %v134 = vadd.s32 %v133, 128
    %135 = vset.pattern.permute.xlu0 0
    %136 = vperm.xlu0 %135, %v77
    %v137 = vpop.permute.xlu0 %136
    %138 = vset.pattern.permute.xlu0 0
    %139 = vperm.xlu0 %138, %v78
    %v140 = vpop.permute.xlu0 %139
    %141 = vset.pattern.permute.xlu0 0
    %142 = vperm.xlu0 %141, %v79
    %v143 = vpop.permute.xlu0 %142
    %144 = vset.pattern.permute.xlu0 0
    %145 = vperm.xlu0 %144, %v80
    %v146 = vpop.permute.xlu0 %145
    %vm147 = vcmp.eq.s32.totalorder %v133, %v137
    %vm148 = vcmp.eq.s32.totalorder %v134, %v137
    %vm149 = vcmp.eq.s32.totalorder %v133, %v140
    %vm150 = vcmp.eq.s32.totalorder %v134, %v140
    %vm151 = vcmp.eq.s32.totalorder %v133, %v143
    %vm152 = vcmp.eq.s32.totalorder %v134, %v143
    %vm153 = vcmp.eq.s32.totalorder %v133, %v146
    %vm154 = vcmp.eq.s32.totalorder %v134, %v146
    %v155 = vsel %vm147, 1, 0
    %v156 = vsel %vm148, 1, 0
    %v157 = vsel %vm149, 1, 0
    %v158 = vsel %vm150, 1, 0
    %v159 = vsel %vm151, 1, 0
    %v160 = vsel %vm152, 1, 0
    %v161 = vsel %vm153, 1, 0
    %v162 = vsel %vm154, 1, 0
    %v163 = vcvt.s32.f32 %v155
    %v164 = vcvt.s32.f32 %v156
    %v165 = vcvt.s32.f32 %v157
    %v166 = vcvt.s32.f32 %v158
    %v167 = vcvt.s32.f32 %v159
    %v168 = vcvt.s32.f32 %v160
    %v169 = vcvt.s32.f32 %v161
    %v170 = vcvt.s32.f32 %v162
    %v171 = vld [vmem:[#allocation2] sm:$0xff]
    %v172 = vld [vmem:[#allocation2 + $0x8] sm:$0xff]
    %v173 = vld [vmem:[#allocation2 + $0x10] sm:$0xff]
    %v174 = vld [vmem:[#allocation2 + $0x18] sm:$0xff]
    %v175 = vld [vmem:[#allocation2 + $0x20] sm:$0xff]
    %v176 = vld [vmem:[#allocation2 + $0x28] sm:$0xff]
    %v177 = vld [vmem:[#allocation2 + $0x30] sm:$0xff]
    %v178 = vld [vmem:[#allocation2 + $0x38] sm:$0xff]
    %v179 = vld [vmem:[#allocation2 + $0x40] sm:$0xff]
    %v180 = vld [vmem:[#allocation2 + $0x48] sm:$0xff]
    %v181 = vld [vmem:[#allocation2 + $0x50] sm:$0xff]
    %v182 = vld [vmem:[#allocation2 + $0x58] sm:$0xff]
    %v183 = vld [vmem:[#allocation2 + $0x60] sm:$0xff]
    %v184 = vld [vmem:[#allocation2 + $0x68] sm:$0xff]
    %v185 = vld [vmem:[#allocation2 + $0x70] sm:$0xff]
    %v186 = vld [vmem:[#allocation2 + $0x78] sm:$0xff]
    %v187 = vld [vmem:[#allocation2 + $0x80] sm:$0xff]
    %v188 = vld [vmem:[#allocation2 + $0x88] sm:$0xff]
    %v189 = vld [vmem:[#allocation2 + $0x90] sm:$0xff]
    %v190 = vld [vmem:[#allocation2 + $0x98] sm:$0xff]
    %v191 = vld [vmem:[#allocation2 + $0xa0] sm:$0xff]
    %v192 = vld [vmem:[#allocation2 + $0xa8] sm:$0xff]
    %v193 = vld [vmem:[#allocation2 + $0xb0] sm:$0xff]
    %v194 = vld [vmem:[#allocation2 + $0xb8] sm:$0xff]
    %v195 = vld [vmem:[#allocation2 + $0xc0] sm:$0xff]
    %v196 = vld [vmem:[#allocation2 + $0xc8] sm:$0xff]
    %v197 = vld [vmem:[#allocation2 + $0xd0] sm:$0xff]
    %v198 = vld [vmem:[#allocation2 + $0xd8] sm:$0xff]
    %v199 = vld [vmem:[#allocation2 + $0xe0] sm:$0xff]
    %v200 = vld [vmem:[#allocation2 + $0xe8] sm:$0xff]
    %v201 = vld [vmem:[#allocation2 + $0xf0] sm:$0xff]
    %v202 = vld [vmem:[#allocation2 + $0xf8] sm:$0xff]
    %203 = vmatpush.msra.mxu0 %v186
    %204 = vmatpush.msra.mxu0 %v185
    %205 = vmatpush.msra.mxu0 %v184
    %206 = vmatpush.msra.mxu0 %v183
    %207 = vmatpush.msra.mxu0 %v182
    %208 = vmatpush.msra.mxu0 %v181
    %209 = vmatpush.msra.mxu0 %v180
    %210 = vmatpush.msra.mxu0 %v179
    %211 = vmatpush.msra.mxu0 %v178
    %212 = vmatpush.msra.mxu0 %v177
    %213 = vmatpush.msra.mxu0 %v176
    %214 = vmatpush.msra.mxu0 %v175
    %215 = vmatpush.msra.mxu0 %v174
    %216 = vmatpush.msra.mxu0 %v173
    %217 = vmatpush.msra.mxu0 %v172
    %218 = vmatpush.msra.mxu0 %v171
    %219 = vmatmul.f32.gmra.mxu0 %v163
    %v220 = vpop.f32.mrf.mxu0
    %v221 = vadd.f32 0.0, %v220
    %222 = vmatmul.f32.gmra.mxu0 %v165
    %v223 = vpop.f32.mrf.mxu0
    %v224 = vadd.f32 0.0, %v223
    %225 = vmatmul.f32.gmra.mxu0 %v167
    %v226 = vpop.f32.mrf.mxu0
    %v227 = vadd.f32 0.0, %v226
    %228 = vmatmul.f32.gmra.mxu0 %v169
    %v229 = vpop.f32.mrf.mxu0
    %v230 = vadd.f32 0.0, %v229
    %231 = vdwg.mxu0
    %232 = vmatpush.msra.mxu0 %v202
    %233 = vmatpush.msra.mxu0 %v201
    %234 = vmatpush.msra.mxu0 %v200
    %235 = vmatpush.msra.mxu0 %v199
    %236 = vmatpush.msra.mxu0 %v198
    %237 = vmatpush.msra.mxu0 %v197
    %238 = vmatpush.msra.mxu0 %v196
    %239 = vmatpush.msra.mxu0 %v195
    %240 = vmatpush.msra.mxu0 %v194
    %241 = vmatpush.msra.mxu0 %v193
    %242 = vmatpush.msra.mxu0 %v192
    %243 = vmatpush.msra.mxu0 %v191
    %244 = vmatpush.msra.mxu0 %v190
    %245 = vmatpush.msra.mxu0 %v189
    %246 = vmatpush.msra.mxu0 %v188
    %247 = vmatpush.msra.mxu0 %v187
    %248 = vmatmul.f32.gmra.mxu0 %v164
    %v249 = vpop.f32.mrf.mxu0
    %v250 = vadd.f32 %v221, %v249
    %251 = vmatmul.f32.gmra.mxu0 %v166
    %v252 = vpop.f32.mrf.mxu0
    %v253 = vadd.f32 %v224, %v252
    %254 = vmatmul.f32.gmra.mxu0 %v168
    %v255 = vpop.f32.mrf.mxu0
    %v256 = vadd.f32 %v227, %v255
    %257 = vmatmul.f32.gmra.mxu0 %v170
    %v258 = vpop.f32.mrf.mxu0
    %v259 = vadd.f32 %v230, %v258
    %260 = vdwg.mxu0
    %v261 = vld [vmem:[%s2] sm:$0xff]
    %262 = vset.pattern.permute.xlu0 2
    %263 = vperm.xlu0 %262, %v77
    %v264 = vpop.permute.xlu0 %263
    %265 = vset.pattern.permute.xlu0 2
    %266 = vperm.xlu0 %265, %v78
    %v267 = vpop.permute.xlu0 %266
    %268 = vset.pattern.permute.xlu0 2
    %269 = vperm.xlu0 %268, %v79
    %v270 = vpop.permute.xlu0 %269
    %271 = vset.pattern.permute.xlu0 2
    %272 = vperm.xlu0 %271, %v80
    %v273 = vpop.permute.xlu0 %272
    %v274 = vperm.slane %v81, 0
    %vm275 = vcmp.eq.s32.totalorder %v264, %v274
    %vm276 = vcmp.eq.s32.totalorder %v267, %v274
    %vm277 = vcmp.eq.s32.totalorder %v270, %v274
    %vm278 = vcmp.eq.s32.totalorder %v273, %v274
    %vm279 = vcmp.gt.s32.totalorder %v77, 0
    %vm280 = vcmp.gt.s32.totalorder %v78, 0
    %vm281 = vcmp.gt.s32.totalorder %v79, 0
    %vm282 = vcmp.gt.s32.totalorder %v80, 0
    %v283 = vsel %vm279, 1, 0
    %v284 = vsel %vm280, 1, 0
    %v285 = vsel %vm281, 1, 0
    %v286 = vsel %vm282, 1, 0
    %287 = vset.pattern.permute.xlu0 2
    %288 = vperm.xlu0 %287, %v283
    %v289 = vpop.permute.xlu0 %288
    %290 = vset.pattern.permute.xlu0 2
    %291 = vperm.xlu0 %290, %v284
    %v292 = vpop.permute.xlu0 %291
    %293 = vset.pattern.permute.xlu0 2
    %294 = vperm.xlu0 %293, %v285
    %v295 = vpop.permute.xlu0 %294
    %296 = vset.pattern.permute.xlu0 2
    %297 = vperm.xlu0 %296, %v286
    %v298 = vpop.permute.xlu0 %297
    %vm299 = vcmp.eq.s32.totalorder %v289, 1
    %vm300 = vcmp.eq.s32.totalorder %v292, 1
    %vm301 = vcmp.eq.s32.totalorder %v295, 1
    %vm302 = vcmp.eq.s32.totalorder %v298, 1
    %vm303 = vmand %vm275, %vm299
    %vm304 = vmand %vm276, %vm300
    %vm305 = vmand %vm277, %vm301
    %vm306 = vmand %vm278, %vm302
    %v307 = vsel %vm303, 1, 0
    %v308 = vsel %vm304, 1, 0
    %v309 = vsel %vm305, 1, 0
    %v310 = vsel %vm306, 1, 0
    %v311 = vcvt.s32.f32 %v307
    %v312 = vcvt.s32.f32 %v308
    %v313 = vcvt.s32.f32 %v309
    %v314 = vcvt.s32.f32 %v310
    %vm315 = vcmask 64512
    %v317 = vsel %vm315, %v311, 0
    %v320 = vsel %vm315, %v312, 0
    %v323 = vsel %vm315, %v313, 0
    %v326 = vsel %vm315, %v314, 0
    %328 = vmatpush.msra.mxu0 0.0
    %329 = vmatpush.msra.mxu0 0.0
    %330 = vmatpush.msra.mxu0 0.0
    %331 = vmatpush.msra.mxu0 0.0
    %332 = vmatpush.msra.mxu0 0.0
    %333 = vmatpush.msra.mxu0 0.0
    %334 = vmatpush.msra.mxu0 0.0
    %335 = vmatpush.msra.mxu0 0.0
    %336 = vmatpush.msra.mxu0 0.0
    %337 = vmatpush.msra.mxu0 0.0
    %338 = vmatpush.msra.mxu0 0.0
    %339 = vmatpush.msra.mxu0 0.0
    %340 = vmatpush.msra.mxu0 0.0
    %341 = vmatpush.msra.mxu0 0.0
    %342 = vmatpush.msra.mxu0 0.0
    %343 = vmatpush.msra.mxu0 %v261
    %344 = vmatmul.f32.gmra.mxu0 %v317
    %v345 = vpop.f32.mrf.mxu0
    %v346 = vadd.f32 0.0, %v345
    %347 = vmatmul.f32.gmra.mxu0 %v320
    %v348 = vpop.f32.mrf.mxu0
    %v349 = vadd.f32 0.0, %v348
    %350 = vmatmul.f32.gmra.mxu0 %v323
    %v351 = vpop.f32.mrf.mxu0
    %v352 = vadd.f32 0.0, %v351
    %353 = vmatmul.f32.gmra.mxu0 %v326
    %v354 = vpop.f32.mrf.mxu0
    %v355 = vadd.f32 0.0, %v354
    %356 = vdwg.mxu0
    %v357 = vsel %vm315, %v311, 0.0
    %358 = vadd.xlane.f32.xlu0 %v357
    %v359 = vpop.xlane.xlu0 %358
    %v360 = vsel %vm315, %v312, 0.0
    %361 = vadd.xlane.f32.xlu0 %v360
    %v362 = vpop.xlane.xlu0 %361
    %v363 = vsel %vm315, %v313, 0.0
    %364 = vadd.xlane.f32.xlu0 %v363
    %v365 = vpop.xlane.xlu0 %364
    %v366 = vsel %vm315, %v314, 0.0
    %367 = vadd.xlane.f32.xlu0 %v366
    %v368 = vpop.xlane.xlu0 %367
    %v369 = vpack.c.bf16 %v349, %v346
    %v370 = vpack.c.bf16 %v355, %v352
    %v371 = vperm.slane %v82, 0
    %v372 = vmul.f32 %v359, %v371
    %v373 = vmul.f32 %v362, %v371
    %v374 = vmul.f32 %v365, %v371
    %v375 = vmul.f32 %v368, %v371
    %v392 = vunpack.c.l.b16 %v84
    %v393 = vunpack.c.l.b16 %v85
    %v394 = vunpack.c.l.b16 %v86
    %v395 = vunpack.c.l.b16 %v87
    %v396 = vunpack.c.l.b16 %v88
    %v397 = vunpack.c.l.b16 %v89
    %v398 = vunpack.c.l.b16 %v90
    %v399 = vunpack.c.l.b16 %v91
    %v400 = vunpack.c.l.b16 %v92
    %v401 = vunpack.c.l.b16 %v93
    %v402 = vunpack.c.l.b16 %v94
    %v403 = vunpack.c.l.b16 %v95
    %v404 = vunpack.c.l.b16 %v96
    %v405 = vunpack.c.l.b16 %v97
    %v406 = vunpack.c.l.b16 %v98
    %v407 = vunpack.c.l.b16 %v99
    %v408 = vpack.c.b16 %v393, %v392
    %v409 = vpack.c.b16 %v395, %v394
    %v410 = vpack.c.b16 %v397, %v396
    %v411 = vpack.c.b16 %v399, %v398
    %v412 = vpack.c.b16 %v401, %v400
    %v413 = vpack.c.b16 %v403, %v402
    %v414 = vpack.c.b16 %v405, %v404
    %v415 = vpack.c.b16 %v407, %v406
    %424 = vmatpush.bf16.msra.mxu0 %v415
    %425 = vmatpush.bf16.msra.mxu0 %v414
    %426 = vmatpush.bf16.msra.mxu0 %v413
    %427 = vmatpush.bf16.msra.mxu0 %v412
    %428 = vmatpush.bf16.msra.mxu0 %v411
    %429 = vmatpush.bf16.msra.mxu0 %v410
    %430 = vmatpush.bf16.msra.mxu0 %v409
    %431 = vmatpush.bf16.msra.mxu0 %v408
    %432 = vmatmul.bf16.gmra.mxu0 %v369
    %v433 = vpop.f32.mrf.mxu0
    %v434 = vadd.f32 %v372, %v433
    %v435 = vpop.f32.mrf.mxu0
    %v436 = vadd.f32 %v373, %v435
    %437 = vmatmul.bf16.gmra.mxu0 %v370
    %v438 = vpop.f32.mrf.mxu0
    %v439 = vadd.f32 %v374, %v438
    %v440 = vpop.f32.mrf.mxu0
    %v441 = vadd.f32 %v375, %v440
    %442 = vdwg.mxu0
    %v443 = vsub.f32 1.0, %v359
    %v444 = vsub.f32 1.0, %v362
    %v445 = vsub.f32 1.0, %v365
    %v446 = vsub.f32 1.0, %v368
    %v447 = vmul.f32 %v250, %v443
    %v448 = vmul.f32 %v253, %v444
    %v449 = vmul.f32 %v256, %v445
    %v450 = vmul.f32 %v259, %v446
    %v451 = vadd.f32 %v447, %v434
    %v452 = vadd.f32 %v448, %v436
    %v453 = vadd.f32 %v449, %v439
    %v454 = vadd.f32 %v450, %v441
    %v455 = vpack.c.bf16 %v452, %v451
    %v456 = vpack.c.bf16 %v454, %v453
    %v457 = vperm.slane %v82, 1
    %v474 = vunpack.c.l.b16 %v100
    %v475 = vunpack.c.l.b16 %v101
    %v476 = vunpack.c.l.b16 %v102
    %v477 = vunpack.c.l.b16 %v103
    %v478 = vunpack.c.l.b16 %v104
    %v479 = vunpack.c.l.b16 %v105
    %v480 = vunpack.c.l.b16 %v106
    %v481 = vunpack.c.l.b16 %v107
    %v482 = vunpack.c.l.b16 %v108
    %v483 = vunpack.c.l.b16 %v109
    %v484 = vunpack.c.l.b16 %v110
    %v485 = vunpack.c.l.b16 %v111
    %v486 = vunpack.c.l.b16 %v112
    %v487 = vunpack.c.l.b16 %v113
    %v488 = vunpack.c.l.b16 %v114
    %v489 = vunpack.c.l.b16 %v115
    %v490 = vpack.c.b16 %v475, %v474
    %v491 = vpack.c.b16 %v477, %v476
    %v492 = vpack.c.b16 %v479, %v478
    %v493 = vpack.c.b16 %v481, %v480
    %v494 = vpack.c.b16 %v483, %v482
    %v495 = vpack.c.b16 %v485, %v484
    %v496 = vpack.c.b16 %v487, %v486
    %v497 = vpack.c.b16 %v489, %v488
    %506 = vmatpush.bf16.msra.mxu0 %v497
    %507 = vmatpush.bf16.msra.mxu0 %v496
    %508 = vmatpush.bf16.msra.mxu0 %v495
    %509 = vmatpush.bf16.msra.mxu0 %v494
    %510 = vmatpush.bf16.msra.mxu0 %v493
    %511 = vmatpush.bf16.msra.mxu0 %v492
    %512 = vmatpush.bf16.msra.mxu0 %v491
    %513 = vmatpush.bf16.msra.mxu0 %v490
    %514 = vmatmul.bf16.gmra.mxu0 %v455
    %v515 = vpop.f32.mrf.mxu0
    %v516 = vadd.f32 %v457, %v515
    %v517 = vpop.f32.mrf.mxu0
    %v518 = vadd.f32 %v457, %v517
    %519 = vmatmul.bf16.gmra.mxu0 %v456
    %v520 = vpop.f32.mrf.mxu0
    %v521 = vadd.f32 %v457, %v520
    %v522 = vpop.f32.mrf.mxu0
    %v523 = vadd.f32 %v457, %v522
    %524 = vdwg.mxu0
    %v525 = vmul.f32 %v516, %v516
    %v526 = vmul.f32 %v518, %v518
    %v527 = vmul.f32 %v521, %v521
    %v528 = vmul.f32 %v523, %v523
    %v529 = vmul.f32 %v516, %v525
    %v530 = vmul.f32 %v518, %v526
    %v531 = vmul.f32 %v521, %v527
    %v532 = vmul.f32 %v523, %v528
    %v533 = vmul.f32 %v529, 0.044715
    %v534 = vmul.f32 %v530, 0.044715
    %v535 = vmul.f32 %v531, 0.044715
    %v536 = vmul.f32 %v532, 0.044715
    %v537 = vadd.f32 %v516, %v533
    %v538 = vadd.f32 %v518, %v534
    %v539 = vadd.f32 %v521, %v535
    %v540 = vadd.f32 %v523, %v536
    %v541 = vmul.f32 %v537, 0.7978846
    %v542 = vmul.f32 %v538, 0.7978846
    %v543 = vmul.f32 %v539, 0.7978846
    %v544 = vmul.f32 %v540, 0.7978846
    %v545 = vtanh.pop %v541
    %v546 = vtanh.pop %v542
    %v547 = vtanh.pop %v543
    %v548 = vtanh.pop %v544
    %v549 = vadd.f32 %v545, 1.0
    %v550 = vadd.f32 %v546, 1.0
    %v551 = vadd.f32 %v547, 1.0
    %v552 = vadd.f32 %v548, 1.0
    %v553 = vmul.f32 %v549, 0.5
    %v554 = vmul.f32 %v550, 0.5
    %v555 = vmul.f32 %v551, 0.5
    %v556 = vmul.f32 %v552, 0.5
    %v557 = vmul.f32 %v516, %v553
    %v558 = vmul.f32 %v518, %v554
    %v559 = vmul.f32 %v521, %v555
    %v560 = vmul.f32 %v523, %v556
    %v561 = vpack.c.bf16 %v558, %v557
    %v562 = vpack.c.bf16 %v560, %v559
    %v563 = vperm.slane %v82, 2
    %v580 = vunpack.c.l.b16 %v116
    %v581 = vunpack.c.l.b16 %v117
    %v582 = vunpack.c.l.b16 %v118
    %v583 = vunpack.c.l.b16 %v119
    %v584 = vunpack.c.l.b16 %v120
    %v585 = vunpack.c.l.b16 %v121
    %v586 = vunpack.c.l.b16 %v122
    %v587 = vunpack.c.l.b16 %v123
    %v588 = vunpack.c.l.b16 %v124
    %v589 = vunpack.c.l.b16 %v125
    %v590 = vunpack.c.l.b16 %v126
    %v591 = vunpack.c.l.b16 %v127
    %v592 = vunpack.c.l.b16 %v128
    %v593 = vunpack.c.l.b16 %v129
    %v594 = vunpack.c.l.b16 %v130
    %v595 = vunpack.c.l.b16 %v131
    %v596 = vpack.c.b16 %v581, %v580
    %v597 = vpack.c.b16 %v583, %v582
    %v598 = vpack.c.b16 %v585, %v584
    %v599 = vpack.c.b16 %v587, %v586
    %v600 = vpack.c.b16 %v589, %v588
    %v601 = vpack.c.b16 %v591, %v590
    %v602 = vpack.c.b16 %v593, %v592
    %v603 = vpack.c.b16 %v595, %v594
    %612 = vmatpush.bf16.msra.mxu0 %v603
    %613 = vmatpush.bf16.msra.mxu0 %v602
    %614 = vmatpush.bf16.msra.mxu0 %v601
    %615 = vmatpush.bf16.msra.mxu0 %v600
    %616 = vmatpush.bf16.msra.mxu0 %v599
    %617 = vmatpush.bf16.msra.mxu0 %v598
    %618 = vmatpush.bf16.msra.mxu0 %v597
    %619 = vmatpush.bf16.msra.mxu0 %v596
    %620 = vmatmul.bf16.gmra.mxu0 %v561
    %v621 = vpop.f32.mrf.mxu0
    %v622 = vadd.f32 %v563, %v621
    %v623 = vpop.f32.mrf.mxu0
    %v624 = vadd.f32 %v563, %v623
    %625 = vmatmul.bf16.gmra.mxu0 %v562
    %v626 = vpop.f32.mrf.mxu0
    %v627 = vadd.f32 %v563, %v626
    %v628 = vpop.f32.mrf.mxu0
    %v629 = vadd.f32 %v563, %v628
    %630 = vdwg.mxu0
    %v631 = vpack.c.bf16 %v624, %v622
    %v632 = vpack.c.bf16 %v629, %v627
    %v633 = vld [vmem:[#allocation7] sm:$0xff]
    %v634 = vld [vmem:[#allocation7 + $0x8] sm:$0xf]
    %v635 = vld [vmem:[#allocation7 + $0xc] sm:$0xff]
    %v636 = vld [vmem:[#allocation7 + $0x14] sm:$0xf]
    %v637 = vld [vmem:[#allocation7 + $0x18] sm:$0xff]
    %v638 = vld [vmem:[#allocation7 + $0x20] sm:$0xf]
    %v639 = vld [vmem:[#allocation7 + $0x24] sm:$0xff]
    %v640 = vld [vmem:[#allocation7 + $0x2c] sm:$0xf]
    %v641 = vld [vmem:[#allocation7 + $0x30] sm:$0xff]
    %v642 = vld [vmem:[#allocation7 + $0x38] sm:$0xf]
    %v643 = vld [vmem:[#allocation7 + $0x3c] sm:$0xff]
    %v644 = vld [vmem:[#allocation7 + $0x44] sm:$0xf]
    %v645 = vld [vmem:[#allocation7 + $0x48] sm:$0xff]
    %v646 = vld [vmem:[#allocation7 + $0x50] sm:$0xf]
    %v647 = vld [vmem:[#allocation7 + $0x54] sm:$0xff]
    %v648 = vld [vmem:[#allocation7 + $0x5c] sm:$0xf]
    %v649 = vld [vmem:[#allocation7 + $0x60] sm:$0xff]
    %v650 = vld [vmem:[#allocation7 + $0x68] sm:$0xf]
    %v651 = vld [vmem:[#allocation7 + $0x6c] sm:$0xff]
    %v652 = vld [vmem:[#allocation7 + $0x74] sm:$0xf]
    %v653 = vld [vmem:[#allocation7 + $0x78] sm:$0xff]
    %v654 = vld [vmem:[#allocation7 + $0x80] sm:$0xf]
    %v655 = vld [vmem:[#allocation7 + $0x84] sm:$0xff]
    %v656 = vld [vmem:[#allocation7 + $0x8c] sm:$0xf]
    %v657 = vld [vmem:[#allocation7 + $0x90] sm:$0xff]
    %v658 = vld [vmem:[#allocation7 + $0x98] sm:$0xf]
    %v659 = vld [vmem:[#allocation7 + $0x9c] sm:$0xff]
    %v660 = vld [vmem:[#allocation7 + $0xa4] sm:$0xf]
    %v661 = vld [vmem:[#allocation7 + $0xa8] sm:$0xff]
    %v662 = vld [vmem:[#allocation7 + $0xb0] sm:$0xf]
    %v663 = vld [vmem:[#allocation7 + $0xb4] sm:$0xff]
    %v664 = vld [vmem:[#allocation7 + $0xbc] sm:$0xf]
    %v667 = vperm.slane %v82, 3
    %v668 = vperm.slane %v82, 7
    %v669 = vperm.slane %v83, 3
    %v673 = vperm.slane %v667, 3
    %v674 = vperm.slane %v668, 3
    %v675 = vperm.slane %v669, 3
    %v708 = vunpack.c.l.b16 %v633
    %v709 = vunpack.c.h.b16 %v633
    %v710 = vunpack.c.l.b16 %v634
    %v711 = vunpack.c.l.b16 %v635
    %v712 = vunpack.c.h.b16 %v635
    %v713 = vunpack.c.l.b16 %v636
    %v714 = vunpack.c.l.b16 %v637
    %v715 = vunpack.c.h.b16 %v637
    %v716 = vunpack.c.l.b16 %v638
    %v717 = vunpack.c.l.b16 %v639
    %v718 = vunpack.c.h.b16 %v639
    %v719 = vunpack.c.l.b16 %v640
    %v720 = vunpack.c.l.b16 %v641
    %v721 = vunpack.c.h.b16 %v641
    %v722 = vunpack.c.l.b16 %v642
    %v723 = vunpack.c.l.b16 %v643
    %v724 = vunpack.c.h.b16 %v643
    %v725 = vunpack.c.l.b16 %v644
    %v726 = vunpack.c.l.b16 %v645
    %v727 = vunpack.c.h.b16 %v645
    %v728 = vunpack.c.l.b16 %v646
    %v729 = vunpack.c.l.b16 %v647
    %v730 = vunpack.c.h.b16 %v647
    %v731 = vunpack.c.l.b16 %v648
    %v732 = vunpack.c.l.b16 %v649
    %v733 = vunpack.c.h.b16 %v649
    %v734 = vunpack.c.l.b16 %v650
    %v735 = vunpack.c.l.b16 %v651
    %v736 = vunpack.c.h.b16 %v651
    %v737 = vunpack.c.l.b16 %v652
    %v738 = vunpack.c.l.b16 %v653
    %v739 = vunpack.c.h.b16 %v653
    %v740 = vunpack.c.l.b16 %v654
    %v741 = vunpack.c.l.b16 %v655
    %v742 = vunpack.c.h.b16 %v655
    %v743 = vunpack.c.l.b16 %v656
    %v744 = vunpack.c.l.b16 %v657
    %v745 = vunpack.c.h.b16 %v657
    %v746 = vunpack.c.l.b16 %v658
    %v747 = vunpack.c.l.b16 %v659
    %v748 = vunpack.c.h.b16 %v659
    %v749 = vunpack.c.l.b16 %v660
    %v750 = vunpack.c.l.b16 %v661
    %v751 = vunpack.c.h.b16 %v661
    %v752 = vunpack.c.l.b16 %v662
    %v753 = vunpack.c.l.b16 %v663
    %v754 = vunpack.c.h.b16 %v663
    %v755 = vunpack.c.l.b16 %v664
    %v756 = vpack.c.b16 %v711, %v708
    %v757 = vpack.c.b16 %v712, %v709
    %v758 = vpack.c.b16 %v713, %v710
    %v759 = vpack.c.b16 %v717, %v714
    %v760 = vpack.c.b16 %v718, %v715
    %v761 = vpack.c.b16 %v719, %v716
    %v762 = vpack.c.b16 %v723, %v720
    %v763 = vpack.c.b16 %v724, %v721
    %v764 = vpack.c.b16 %v725, %v722
    %v765 = vpack.c.b16 %v729, %v726
    %v766 = vpack.c.b16 %v730, %v727
    %v767 = vpack.c.b16 %v731, %v728
    %v768 = vpack.c.b16 %v735, %v732
    %v769 = vpack.c.b16 %v736, %v733
    %v770 = vpack.c.b16 %v737, %v734
    %v771 = vpack.c.b16 %v741, %v738
    %v772 = vpack.c.b16 %v742, %v739
    %v773 = vpack.c.b16 %v743, %v740
    %v774 = vpack.c.b16 %v747, %v744
    %v775 = vpack.c.b16 %v748, %v745
    %v776 = vpack.c.b16 %v749, %v746
    %v777 = vpack.c.b16 %v753, %v750
    %v778 = vpack.c.b16 %v754, %v751
    %v779 = vpack.c.b16 %v755, %v752
    %804 = vmatpush.bf16.msra.mxu0 %v777
    %805 = vmatpush.bf16.msra.mxu0 %v774
    %806 = vmatpush.bf16.msra.mxu0 %v771
    %807 = vmatpush.bf16.msra.mxu0 %v768
    %808 = vmatpush.bf16.msra.mxu0 %v765
    %809 = vmatpush.bf16.msra.mxu0 %v762
    %810 = vmatpush.bf16.msra.mxu0 %v759
    %811 = vmatpush.bf16.msra.mxu0 %v756
    %812 = vmatmul.bf16.gmra.mxu0 %v631
    %v813 = vpop.f32.mrf.mxu0
    %v814 = vadd.f32 %v673, %v813
    %v815 = vpop.f32.mrf.mxu0
    %v816 = vadd.f32 %v673, %v815
    %817 = vmatmul.bf16.gmra.mxu0 %v632
    %v818 = vpop.f32.mrf.mxu0
    %v819 = vadd.f32 %v673, %v818
    %v820 = vpop.f32.mrf.mxu0
    %v821 = vadd.f32 %v673, %v820
    %822 = vdwg.mxu0
    %823 = vmatpush.bf16.msra.mxu0 %v778
    %824 = vmatpush.bf16.msra.mxu0 %v775
    %825 = vmatpush.bf16.msra.mxu0 %v772
    %826 = vmatpush.bf16.msra.mxu0 %v769
    %827 = vmatpush.bf16.msra.mxu0 %v766
    %828 = vmatpush.bf16.msra.mxu0 %v763
    %829 = vmatpush.bf16.msra.mxu0 %v760
    %830 = vmatpush.bf16.msra.mxu0 %v757
    %831 = vmatmul.bf16.gmra.mxu0 %v631
    %v832 = vpop.f32.mrf.mxu0
    %v833 = vadd.f32 %v674, %v832
    %v834 = vpop.f32.mrf.mxu0
    %v835 = vadd.f32 %v674, %v834
    %836 = vmatmul.bf16.gmra.mxu0 %v632
    %v837 = vpop.f32.mrf.mxu0
    %v838 = vadd.f32 %v674, %v837
    %v839 = vpop.f32.mrf.mxu0
    %v840 = vadd.f32 %v674, %v839
    %841 = vdwg.mxu0
    %842 = vmatpush.bf16.msra.mxu0 %v779
    %843 = vmatpush.bf16.msra.mxu0 %v776
    %844 = vmatpush.bf16.msra.mxu0 %v773
    %845 = vmatpush.bf16.msra.mxu0 %v770
    %846 = vmatpush.bf16.msra.mxu0 %v767
    %847 = vmatpush.bf16.msra.mxu0 %v764
    %848 = vmatpush.bf16.msra.mxu0 %v761
    %849 = vmatpush.bf16.msra.mxu0 %v758
    %850 = vmatmul.bf16.gmra.mxu0 %v631
    %v851 = vpop.f32.mrf.mxu0
    %v852 = vadd.f32 %v675, %v851
    %v853 = vpop.f32.mrf.mxu0
    %v854 = vadd.f32 %v675, %v853
    %855 = vmatmul.bf16.gmra.mxu0 %v632
    %v856 = vpop.f32.mrf.mxu0
    %v857 = vadd.f32 %v675, %v856
    %v858 = vpop.f32.mrf.mxu0
    %v859 = vadd.f32 %v675, %v858
    %860 = vdwg.mxu0
    %861 = vset.pattern.permute.xlu0 1
    %862 = vperm.xlu0 %861, %v77
    %v863 = vpop.permute.xlu0 %862
    %864 = vset.pattern.permute.xlu0 1
    %865 = vperm.xlu0 %864, %v78
    %v866 = vpop.permute.xlu0 %865
    %867 = vset.pattern.permute.xlu0 1
    %868 = vperm.xlu0 %867, %v79
    %v869 = vpop.permute.xlu0 %868
    %870 = vset.pattern.permute.xlu0 1
    %871 = vperm.xlu0 %870, %v80
    %v872 = vpop.permute.xlu0 %871
    %vm873 = vcmp.eq.s32.totalorder %v133, %v863
    %vm874 = vcmp.eq.s32.totalorder %v134, %v863
    %vm875 = vcmp.eq.s32.totalorder %v133, %v866
    %vm876 = vcmp.eq.s32.totalorder %v134, %v866
    %vm877 = vcmp.eq.s32.totalorder %v133, %v869
    %vm878 = vcmp.eq.s32.totalorder %v134, %v869
    %vm879 = vcmp.eq.s32.totalorder %v133, %v872
    %vm880 = vcmp.eq.s32.totalorder %v134, %v872
    %vm881 = vcmp.ge.s32.totalorder %v77, 0
    %vm882 = vcmp.ge.s32.totalorder %v78, 0
    %vm883 = vcmp.ge.s32.totalorder %v79, 0
    %vm884 = vcmp.ge.s32.totalorder %v80, 0
    %v885 = vsel %vm881, 1, 0
    %v886 = vsel %vm882, 1, 0
    %v887 = vsel %vm883, 1, 0
    %v888 = vsel %vm884, 1, 0
    %889 = vset.pattern.permute.xlu0 1
    %890 = vperm.xlu0 %889, %v885
    %v891 = vpop.permute.xlu0 %890
    %892 = vset.pattern.permute.xlu0 1
    %893 = vperm.xlu0 %892, %v886
    %v894 = vpop.permute.xlu0 %893
    %895 = vset.pattern.permute.xlu0 1
    %896 = vperm.xlu0 %895, %v887
    %v897 = vpop.permute.xlu0 %896
    %898 = vset.pattern.permute.xlu0 1
    %899 = vperm.xlu0 %898, %v888
    %v900 = vpop.permute.xlu0 %899
    %vm901 = vcmp.eq.s32.totalorder %v891, 1
    %vm902 = vcmp.eq.s32.totalorder %v894, 1
    %vm903 = vcmp.eq.s32.totalorder %v897, 1
    %vm904 = vcmp.eq.s32.totalorder %v900, 1
    %vm905 = vmand %vm873, %vm901
    %vm906 = vmand %vm874, %vm901
    %vm907 = vmand %vm875, %vm902
    %vm908 = vmand %vm876, %vm902
    %vm909 = vmand %vm877, %vm903
    %vm910 = vmand %vm878, %vm903
    %vm911 = vmand %vm879, %vm904
    %vm912 = vmand %vm880, %vm904
    %v913 = vsel %vm905, 1, 0
    %v914 = vsel %vm906, 1, 0
    %v915 = vsel %vm907, 1, 0
    %v916 = vsel %vm908, 1, 0
    %v917 = vsel %vm909, 1, 0
    %v918 = vsel %vm910, 1, 0
    %v919 = vsel %vm911, 1, 0
    %v920 = vsel %vm912, 1, 0
    %v921 = vcvt.s32.f32 %v913
    %v922 = vcvt.s32.f32 %v914
    %v923 = vcvt.s32.f32 %v915
    %v924 = vcvt.s32.f32 %v916
    %v925 = vcvt.s32.f32 %v917
    %v926 = vcvt.s32.f32 %v918
    %v927 = vcvt.s32.f32 %v919
    %v928 = vcvt.s32.f32 %v920
    %v929 = vmax.f32 %v814, %v833
    %930 = vmax.xlane.f32.xlu0 %v929
    %v931 = vpop.xlane.xlu0 %930
    %v932 = vmax.f32 %v816, %v835
    %933 = vmax.xlane.f32.xlu0 %v932
    %v934 = vpop.xlane.xlu0 %933
    %v935 = vmax.f32 %v819, %v838
    %936 = vmax.xlane.f32.xlu0 %v935
    %v937 = vpop.xlane.xlu0 %936
    %v938 = vmax.f32 %v821, %v840
    %939 = vmax.xlane.f32.xlu0 %v938
    %v940 = vpop.xlane.xlu0 %939
    %v941 = vsub.f32 %v814, %v931
    %v942 = vsub.f32 %v833, %v931
    %v943 = vsub.f32 %v816, %v934
    %v944 = vsub.f32 %v835, %v934
    %v945 = vsub.f32 %v819, %v937
    %v946 = vsub.f32 %v838, %v937
    %v947 = vsub.f32 %v821, %v940
    %v948 = vsub.f32 %v840, %v940
    %v949 = vmul.f32 %v941, 1.442695
    %v950 = vpow.pop %v949
    %v951 = vmul.f32 %v942, 1.442695
    %v952 = vpow.pop %v951
    %v953 = vmul.f32 %v943, 1.442695
    %v954 = vpow.pop %v953
    %v955 = vmul.f32 %v944, 1.442695
    %v956 = vpow.pop %v955
    %v957 = vmul.f32 %v945, 1.442695
    %v958 = vpow.pop %v957
    %v959 = vmul.f32 %v946, 1.442695
    %v960 = vpow.pop %v959
    %v961 = vmul.f32 %v947, 1.442695
    %v962 = vpow.pop %v961
    %v963 = vmul.f32 %v948, 1.442695
    %v964 = vpow.pop %v963
    %v965 = vadd.f32 %v950, %v952
    %966 = vadd.xlane.f32.xlu0 %v965
    %v967 = vpop.xlane.xlu0 %966
    %v968 = vadd.f32 %v954, %v956
    %969 = vadd.xlane.f32.xlu0 %v968
    %v970 = vpop.xlane.xlu0 %969
    %v971 = vadd.f32 %v958, %v960
    %972 = vadd.xlane.f32.xlu0 %v971
    %v973 = vpop.xlane.xlu0 %972
    %v974 = vadd.f32 %v962, %v964
    %975 = vadd.xlane.f32.xlu0 %v974
    %v976 = vpop.xlane.xlu0 %975
    %v977 = vlog2.pop %v967
    %v978 = vmul.f32 %v977, 0.6931472
    %v979 = vlog2.pop %v970
    %v980 = vmul.f32 %v979, 0.6931472
    %v981 = vlog2.pop %v973
    %v982 = vmul.f32 %v981, 0.6931472
    %v983 = vlog2.pop %v976
    %v984 = vmul.f32 %v983, 0.6931472
    %v985 = vmul.f32 %v921, %v941
    %v986 = vmul.f32 %v922, %v942
    %v987 = vmul.f32 %v923, %v943
    %v988 = vmul.f32 %v924, %v944
    %v989 = vmul.f32 %v925, %v945
    %v990 = vmul.f32 %v926, %v946
    %v991 = vmul.f32 %v927, %v947
    %v992 = vmul.f32 %v928, %v948
    %v993 = vadd.f32 %v985, %v986
    %994 = vadd.xlane.f32.xlu0 %v993
    %v995 = vpop.xlane.xlu0 %994
    %v996 = vadd.f32 %v987, %v988
    %997 = vadd.xlane.f32.xlu0 %v996
    %v998 = vpop.xlane.xlu0 %997
    %v999 = vadd.f32 %v989, %v990
    %1000 = vadd.xlane.f32.xlu0 %v999
    %v1001 = vpop.xlane.xlu0 %1000
    %v1002 = vadd.f32 %v991, %v992
    %1003 = vadd.xlane.f32.xlu0 %v1002
    %v1004 = vpop.xlane.xlu0 %1003
    %v1005 = vadd.f32 %v921, %v922
    %1006 = vadd.xlane.f32.xlu0 %v1005
    %v1007 = vpop.xlane.xlu0 %1006
    %v1008 = vadd.f32 %v923, %v924
    %1009 = vadd.xlane.f32.xlu0 %v1008
    %v1010 = vpop.xlane.xlu0 %1009
    %v1011 = vadd.f32 %v925, %v926
    %1012 = vadd.xlane.f32.xlu0 %v1011
    %v1013 = vpop.xlane.xlu0 %1012
    %v1014 = vadd.f32 %v927, %v928
    %1015 = vadd.xlane.f32.xlu0 %v1014
    %v1016 = vpop.xlane.xlu0 %1015
    %v1017 = vsub.f32 %v978, %v995
    %v1018 = vsub.f32 %v980, %v998
    %v1019 = vsub.f32 %v982, %v1001
    %v1020 = vsub.f32 %v984, %v1004
    %v1021 = vmul.f32 %v1017, %v1007
    %v1022 = vmul.f32 %v1018, %v1010
    %v1023 = vmul.f32 %v1019, %v1013
    %v1024 = vmul.f32 %v1020, %v1016
    %vm1025 = vcmask 7168
    %v1026 = vsel %vm1025, %v1021, 0.0
    %v1027 = vsel %vm1025, %v1022, 0.0
    %v1028 = vadd.f32 %v1026, %v1027
    %v1029 = vsel %vm1025, %v1023, 0.0
    %v1030 = vadd.f32 %v1028, %v1029
    %v1031 = vsel %vm1025, %v1024, 0.0
    %v1032 = vadd.f32 %v1030, %v1031
    %1033 = vadd.xlane.f32.xlu0 %v1032
    %v1034 = vpop.xlane.xlu0 %1033
    %v1035 = vrot.slane %v1034, 4
    %v1036 = vadd.f32 %v1034, %v1035
    %v1037 = vrot.slane %v1036, 2
    %v1038 = vadd.f32 %v1036, %v1037
    %v1039 = vrot.slane %v1038, 1
    %v1040 = vadd.f32 %v1038, %v1039
    %s1041 = vtos %v1040
    %v1042 = vsel %vm1025, %v1007, 0.0
    %v1043 = vsel %vm1025, %v1010, 0.0
    %v1044 = vadd.f32 %v1042, %v1043
    %v1045 = vsel %vm1025, %v1013, 0.0
    %v1046 = vadd.f32 %v1044, %v1045
    %v1047 = vsel %vm1025, %v1016, 0.0
    %v1048 = vadd.f32 %v1046, %v1047
    %1049 = vadd.xlane.f32.xlu0 %v1048
    %v1050 = vpop.xlane.xlu0 %1049
    %v1051 = vrot.slane %v1050, 4
    %v1052 = vadd.f32 %v1050, %v1051
    %v1053 = vrot.slane %v1052, 2
    %v1054 = vadd.f32 %v1052, %v1053
    %v1055 = vrot.slane %v1054, 1
    %v1056 = vadd.f32 %v1054, %v1055
    %s1057 = vtos %v1056
    %1058 = vset.pattern.permute.xlu0 3
    %1059 = vperm.xlu0 %1058, %v77
    %v1060 = vpop.permute.xlu0 %1059
    %1061 = vset.pattern.permute.xlu0 3
    %1062 = vperm.xlu0 %1061, %v78
    %v1063 = vpop.permute.xlu0 %1062
    %1064 = vset.pattern.permute.xlu0 3
    %1065 = vperm.xlu0 %1064, %v79
    %v1066 = vpop.permute.xlu0 %1065
    %1067 = vset.pattern.permute.xlu0 3
    %1068 = vperm.xlu0 %1067, %v80
    %v1069 = vpop.permute.xlu0 %1068
    %v1070 = vperm.slane %v81, 1
    %vm1071 = vcmp.eq.s32.totalorder %v1060, %v1070
    %vm1072 = vcmp.eq.s32.totalorder %v1063, %v1070
    %vm1073 = vcmp.eq.s32.totalorder %v1066, %v1070
    %vm1074 = vcmp.eq.s32.totalorder %v1069, %v1070
    %1075 = vset.pattern.permute.xlu0 3
    %1076 = vperm.xlu0 %1075, %v283
    %v1077 = vpop.permute.xlu0 %1076
    %1078 = vset.pattern.permute.xlu0 3
    %1079 = vperm.xlu0 %1078, %v284
    %v1080 = vpop.permute.xlu0 %1079
    %1081 = vset.pattern.permute.xlu0 3
    %1082 = vperm.xlu0 %1081, %v285
    %v1083 = vpop.permute.xlu0 %1082
    %1084 = vset.pattern.permute.xlu0 3
    %1085 = vperm.xlu0 %1084, %v286
    %v1086 = vpop.permute.xlu0 %1085
    %vm1087 = vcmp.eq.s32.totalorder %v1077, 1
    %vm1088 = vcmp.eq.s32.totalorder %v1080, 1
    %vm1089 = vcmp.eq.s32.totalorder %v1083, 1
    %vm1090 = vcmp.eq.s32.totalorder %v1086, 1
    %vm1091 = vmand %vm1071, %vm1087
    %vm1092 = vmand %vm1072, %vm1088
    %vm1093 = vmand %vm1073, %vm1089
    %vm1094 = vmand %vm1074, %vm1090
    %v1095 = vsel %vm1091, 1, 0
    %v1096 = vsel %vm1092, 1, 0
    %v1097 = vsel %vm1093, 1, 0
    %v1098 = vsel %vm1094, 1, 0
    %v1099 = vcvt.s32.f32 %v1095
    %v1100 = vcvt.s32.f32 %v1096
    %v1101 = vcvt.s32.f32 %v1097
    %v1102 = vcvt.s32.f32 %v1098
    %v1104 = vsel %vm315, %v1099, 0
    %v1107 = vsel %vm315, %v1100, 0
    %v1110 = vsel %vm315, %v1101, 0
    %v1113 = vsel %vm315, %v1102, 0
    %1115 = vmatpush.msra.mxu0 0.0
    %1116 = vmatpush.msra.mxu0 0.0
    %1117 = vmatpush.msra.mxu0 0.0
    %1118 = vmatpush.msra.mxu0 0.0
    %1119 = vmatpush.msra.mxu0 0.0
    %1120 = vmatpush.msra.mxu0 0.0
    %1121 = vmatpush.msra.mxu0 0.0
    %1122 = vmatpush.msra.mxu0 0.0
    %1123 = vmatpush.msra.mxu0 0.0
    %1124 = vmatpush.msra.mxu0 0.0
    %1125 = vmatpush.msra.mxu0 0.0
    %1126 = vmatpush.msra.mxu0 0.0
    %1127 = vmatpush.msra.mxu0 0.0
    %1128 = vmatpush.msra.mxu0 0.0
    %1129 = vmatpush.msra.mxu0 0.0
    %1130 = vmatpush.msra.mxu0 %v261
    %1131 = vmatmul.f32.gmra.mxu0 %v1104
    %v1132 = vpop.f32.mrf.mxu0
    %v1133 = vadd.f32 0.0, %v1132
    %1134 = vmatmul.f32.gmra.mxu0 %v1107
    %v1135 = vpop.f32.mrf.mxu0
    %v1136 = vadd.f32 0.0, %v1135
    %1137 = vmatmul.f32.gmra.mxu0 %v1110
    %v1138 = vpop.f32.mrf.mxu0
    %v1139 = vadd.f32 0.0, %v1138
    %1140 = vmatmul.f32.gmra.mxu0 %v1113
    %v1141 = vpop.f32.mrf.mxu0
    %v1142 = vadd.f32 0.0, %v1141
    %1143 = vdwg.mxu0
    %v1144 = vsel %vm315, %v1099, 0.0
    %1145 = vadd.xlane.f32.xlu0 %v1144
    %v1146 = vpop.xlane.xlu0 %1145
    %v1147 = vsel %vm315, %v1100, 0.0
    %1148 = vadd.xlane.f32.xlu0 %v1147
    %v1149 = vpop.xlane.xlu0 %1148
    %v1150 = vsel %vm315, %v1101, 0.0
    %1151 = vadd.xlane.f32.xlu0 %v1150
    %v1152 = vpop.xlane.xlu0 %1151
    %v1153 = vsel %vm315, %v1102, 0.0
    %1154 = vadd.xlane.f32.xlu0 %v1153
    %v1155 = vpop.xlane.xlu0 %1154
    %v1156 = vmul.f32 %v852, %v852
    %v1157 = vmul.f32 %v854, %v854
    %v1158 = vmul.f32 %v857, %v857
    %v1159 = vmul.f32 %v859, %v859
    %1160 = vadd.xlane.f32.xlu0 %v1156
    %v1161 = vpop.xlane.xlu0 %1160
    %1162 = vadd.xlane.f32.xlu0 %v1157
    %v1163 = vpop.xlane.xlu0 %1162
    %1164 = vadd.xlane.f32.xlu0 %v1158
    %v1165 = vpop.xlane.xlu0 %1164
    %1166 = vadd.xlane.f32.xlu0 %v1159
    %v1167 = vpop.xlane.xlu0 %1166
    %v1168 = vmax.f32 %v1161, 1e-12
    %v1169 = vmax.f32 %v1163, 1e-12
    %v1170 = vmax.f32 %v1165, 1e-12
    %v1171 = vmax.f32 %v1167, 1e-12
    %v1172 = vrsqrt.pop %v1168
    %v1173 = vmul.f32 %v1172, %v1168
    %v1174 = vmul.f32 %v1173, %v1172
    %v1175 = vmul.f32 0.5, %v1174
    %v1176 = vsub.f32 1.5, %v1175
    %v1177 = vmul.f32 %v1172, %v1176
    %vm1178 = vweird.f32 %v1168
    %vm1179 = vweird.f32 %v1172
    %vm1180 = vmor %vm1178, %vm1179
    %v1181 = vsel %vm1180, %v1172, %v1177
    %v1182 = vrsqrt.pop %v1169
    %v1183 = vmul.f32 %v1182, %v1169
    %v1184 = vmul.f32 %v1183, %v1182
    %v1185 = vmul.f32 0.5, %v1184
    %v1186 = vsub.f32 1.5, %v1185
    %v1187 = vmul.f32 %v1182, %v1186
    %vm1188 = vweird.f32 %v1169
    %vm1189 = vweird.f32 %v1182
    %vm1190 = vmor %vm1188, %vm1189
    %v1191 = vsel %vm1190, %v1182, %v1187
    %v1192 = vrsqrt.pop %v1170
    %v1193 = vmul.f32 %v1192, %v1170
    %v1194 = vmul.f32 %v1193, %v1192
    %v1195 = vmul.f32 0.5, %v1194
    %v1196 = vsub.f32 1.5, %v1195
    %v1197 = vmul.f32 %v1192, %v1196
    %vm1198 = vweird.f32 %v1170
    %vm1199 = vweird.f32 %v1192
    %vm1200 = vmor %vm1198, %vm1199
    %v1201 = vsel %vm1200, %v1192, %v1197
    %v1202 = vrsqrt.pop %v1171
    %v1203 = vmul.f32 %v1202, %v1171
    %v1204 = vmul.f32 %v1203, %v1202
    %v1205 = vmul.f32 0.5, %v1204
    %v1206 = vsub.f32 1.5, %v1205
    %v1207 = vmul.f32 %v1202, %v1206
    %vm1208 = vweird.f32 %v1171
    %vm1209 = vweird.f32 %v1202
    %vm1210 = vmor %vm1208, %vm1209
    %v1211 = vsel %vm1210, %v1202, %v1207
    %v1212 = vmul.f32 %v1133, %v1133
    %v1213 = vmul.f32 %v1136, %v1136
    %v1214 = vmul.f32 %v1139, %v1139
    %v1215 = vmul.f32 %v1142, %v1142
    %1216 = vadd.xlane.f32.xlu0 %v1212
    %v1217 = vpop.xlane.xlu0 %1216
    %1218 = vadd.xlane.f32.xlu0 %v1213
    %v1219 = vpop.xlane.xlu0 %1218
    %1220 = vadd.xlane.f32.xlu0 %v1214
    %v1221 = vpop.xlane.xlu0 %1220
    %1222 = vadd.xlane.f32.xlu0 %v1215
    %v1223 = vpop.xlane.xlu0 %1222
    %v1224 = vmax.f32 %v1217, 1e-12
    %v1225 = vmax.f32 %v1219, 1e-12
    %v1226 = vmax.f32 %v1221, 1e-12
    %v1227 = vmax.f32 %v1223, 1e-12
    %v1228 = vrsqrt.pop %v1224
    %v1229 = vmul.f32 %v1228, %v1224
    %v1230 = vmul.f32 %v1229, %v1228
    %v1231 = vmul.f32 0.5, %v1230
    %v1232 = vsub.f32 1.5, %v1231
    %v1233 = vmul.f32 %v1228, %v1232
    %vm1234 = vweird.f32 %v1224
    %vm1235 = vweird.f32 %v1228
    %vm1236 = vmor %vm1234, %vm1235
    %v1237 = vsel %vm1236, %v1228, %v1233
    %v1238 = vrsqrt.pop %v1225
    %v1239 = vmul.f32 %v1238, %v1225
    %v1240 = vmul.f32 %v1239, %v1238
    %v1241 = vmul.f32 0.5, %v1240
    %v1242 = vsub.f32 1.5, %v1241
    %v1243 = vmul.f32 %v1238, %v1242
    %vm1244 = vweird.f32 %v1225
    %vm1245 = vweird.f32 %v1238
    %vm1246 = vmor %vm1244, %vm1245
    %v1247 = vsel %vm1246, %v1238, %v1243
    %v1248 = vrsqrt.pop %v1226
    %v1249 = vmul.f32 %v1248, %v1226
    %v1250 = vmul.f32 %v1249, %v1248
    %v1251 = vmul.f32 0.5, %v1250
    %v1252 = vsub.f32 1.5, %v1251
    %v1253 = vmul.f32 %v1248, %v1252
    %vm1254 = vweird.f32 %v1226
    %vm1255 = vweird.f32 %v1248
    %vm1256 = vmor %vm1254, %vm1255
    %v1257 = vsel %vm1256, %v1248, %v1253
    %v1258 = vrsqrt.pop %v1227
    %v1259 = vmul.f32 %v1258, %v1227
    %v1260 = vmul.f32 %v1259, %v1258
    %v1261 = vmul.f32 0.5, %v1260
    %v1262 = vsub.f32 1.5, %v1261
    %v1263 = vmul.f32 %v1258, %v1262
    %vm1264 = vweird.f32 %v1227
    %vm1265 = vweird.f32 %v1258
    %vm1266 = vmor %vm1264, %vm1265
    %v1267 = vsel %vm1266, %v1258, %v1263
    %v1268 = vmul.f32 %v852, %v1181
    %v1269 = vmul.f32 %v854, %v1191
    %v1270 = vmul.f32 %v857, %v1201
    %v1271 = vmul.f32 %v859, %v1211
    %v1272 = vmul.f32 %v1133, %v1237
    %v1273 = vmul.f32 %v1136, %v1247
    %v1274 = vmul.f32 %v1139, %v1257
    %v1275 = vmul.f32 %v1142, %v1267
    %v1276 = vmul.f32 %v1268, %v1272
    %v1277 = vmul.f32 %v1269, %v1273
    %v1278 = vmul.f32 %v1270, %v1274
    %v1279 = vmul.f32 %v1271, %v1275
    %1280 = vadd.xlane.f32.xlu0 %v1276
    %v1281 = vpop.xlane.xlu0 %1280
    %1282 = vadd.xlane.f32.xlu0 %v1277
    %v1283 = vpop.xlane.xlu0 %1282
    %1284 = vadd.xlane.f32.xlu0 %v1278
    %v1285 = vpop.xlane.xlu0 %1284
    %1286 = vadd.xlane.f32.xlu0 %v1279
    %v1287 = vpop.xlane.xlu0 %1286
    %v1288 = vsub.f32 1.0, %v1281
    %v1289 = vsub.f32 1.0, %v1283
    %v1290 = vsub.f32 1.0, %v1285
    %v1291 = vsub.f32 1.0, %v1287
    %v1292 = vmul.f32 %v1288, %v1146
    %v1293 = vmul.f32 %v1289, %v1149
    %v1294 = vmul.f32 %v1290, %v1152
    %v1295 = vmul.f32 %v1291, %v1155
    %v1296 = vsel %vm1025, %v1292, 0.0
    %v1297 = vsel %vm1025, %v1293, 0.0
    %v1298 = vadd.f32 %v1296, %v1297
    %v1299 = vsel %vm1025, %v1294, 0.0
    %v1300 = vadd.f32 %v1298, %v1299
    %v1301 = vsel %vm1025, %v1295, 0.0
    %v1302 = vadd.f32 %v1300, %v1301
    %1303 = vadd.xlane.f32.xlu0 %v1302
    %v1304 = vpop.xlane.xlu0 %1303
    %v1305 = vrot.slane %v1304, 4
    %v1306 = vadd.f32 %v1304, %v1305
    %v1307 = vrot.slane %v1306, 2
    %v1308 = vadd.f32 %v1306, %v1307
    %v1309 = vrot.slane %v1308, 1
    %v1310 = vadd.f32 %v1308, %v1309
    %s1311 = vtos %v1310
    %v1312 = vsel %vm1025, %v1146, 0.0
    %v1313 = vsel %vm1025, %v1149, 0.0
    %v1314 = vadd.f32 %v1312, %v1313
    %v1315 = vsel %vm1025, %v1152, 0.0
    %v1316 = vadd.f32 %v1314, %v1315
    %v1317 = vsel %vm1025, %v1155, 0.0
    %v1318 = vadd.f32 %v1316, %v1317
    %1319 = vadd.xlane.f32.xlu0 %v1318
    %v1320 = vpop.xlane.xlu0 %1319
    %v1321 = vrot.slane %v1320, 4
    %v1322 = vadd.f32 %v1320, %v1321
    %v1323 = vrot.slane %v1322, 2
    %v1324 = vadd.f32 %v1322, %v1323
    %v1325 = vrot.slane %v1324, 1
    %v1326 = vadd.f32 %v1324, %v1325
    %s1327 = vtos %v1326
    %s1328 = smax.f32 %s1057, 1.0
    %v1329 = vstv %s1328
    %v1330 = vrcp.pop %v1329
    %v1331 = vmul.f32 %v1329, %v1330
    %v1332 = vsub.f32 1.0, %v1331
    %v1333 = vmul.f32 %v1330, %v1332
    %v1334 = vadd.f32 %v1330, %v1333
    %vm1335 = vweird.f32 %v1329
    %vm1336 = vweird.f32 %v1330
    %vm1337 = vmor %vm1335, %vm1336
    %v1338 = vsel %vm1337, %v1330, %v1334
    %v1339 = vand.u32 2147483647, %v1329
    %vm1340 = vcmp.eq.f32.partialorder %v1339, 8.507059e+37
    %v1341 = vand.u32 %v1329, 2147483648
    %v1342 = vor.u32 1.1754944e-38, %v1341
    %v1343 = vsel %vm1340, %v1342, %v1338
    %s1344 = vtos %v1343
    %s1345 = smul.f32 %s1041, %s1344
    %s1346 = smax.f32 %s1327, 1.0
    %v1347 = vstv %s1346
    %v1348 = vrcp.pop %v1347
    %v1349 = vmul.f32 %v1347, %v1348
    %v1350 = vsub.f32 1.0, %v1349
    %v1351 = vmul.f32 %v1348, %v1350
    %v1352 = vadd.f32 %v1348, %v1351
    %vm1353 = vweird.f32 %v1347
    %vm1354 = vweird.f32 %v1348
    %vm1355 = vmor %vm1353, %vm1354
    %v1356 = vsel %vm1355, %v1348, %v1352
    %v1357 = vand.u32 2147483647, %v1347
    %vm1358 = vcmp.eq.f32.partialorder %v1357, 8.507059e+37
    %v1359 = vand.u32 %v1347, 2147483648
    %v1360 = vor.u32 1.1754944e-38, %v1359
    %v1361 = vsel %vm1358, %v1360, %v1356
    %s1362 = vtos %v1361
    %s1363 = smul.f32 %s1311, %s1362
    %s1364 = sadd.f32 %s1345, %s1363
    %vm1365 = vcmp.eq.s32.totalorder %v133, 0
    %v1366 = vstv %s1364
    %v1367 = vsel %vm1365, %v1366, 0.0
    %vm1368 = vcmp.eq.s32.totalorder %v133, 1
    %v1369 = vstv %s1345
    %v1370 = vsel %vm1368, %v1369, 0.0
    %v1371 = vadd.f32 %v1367, %v1370
    %vm1372 = vcmp.eq.s32.totalorder %v133, 2
    %v1373 = vstv %s1363
    %v1374 = vsel %vm1372, %v1373, 0.0
    %v1375 = vadd.f32 %v1371, %v1374
    %1376 = vst [vmem:[#allocation8] sm:$0xff] %v1375
    %1377 = vst [vmem:[#allocation9] sm:$0xff] %v852
    %1378 = vst [vmem:[#allocation9 + $0x8] sm:$0xff] %v854
    %1379 = vst [vmem:[#allocation9 + $0x10] sm:$0xff] %v857
    %1380 = vst [vmem:[#allocation9 + $0x18] sm:$0xff] %v859
    // Predicated region
    $region42: #{tpu_custom_call.1} parent=1 // pred_check
      _
    $region43: #{tpu_custom_call.1} parent=1 // pred_check_branch
      %1382 = sbr.rel (0) target = $region45
    $region44: #{tpu_custom_call.1} parent=1 // pred_region
      %1384 = vsyncadd [#allocation4], 0
      %s1386 = sshll.u32 [#allocation8], 4
      %s1387 = int_to_ptr.vmem [resolvable:$true] %s1386
      %s1388 = sshll.u32 %s7, 4
      %s1389 = int_to_ptr.hbm [resolvable:$true] %s1388
      %1391 = dma.vmem_to_hbm [thread:$0]  %s1387, 128, %s1389, [#allocation4]
    $region45: #{tpu_custom_call.1} parent=1 // pred_fallthru
      _
    // Predicated region
    $region46: #{tpu_custom_call.1} parent=1 // pred_check
      _
    $region47: #{tpu_custom_call.1} parent=1 // pred_check_branch
      %1393 = sbr.rel (0) target = $region49
    $region48: #{tpu_custom_call.1} parent=1 // pred_region
      %1395 = vsyncadd [#allocation10], 0
      %s1396 = sshll.u32 [#allocation9], 4
      %s1397 = int_to_ptr.vmem [resolvable:$true] %s1396
      %s1398 = sshll.u32 %s8, 4
      %s1399 = int_to_ptr.hbm [resolvable:$true] %s1398
      %1404 = dma.vmem_to_hbm [thread:$0]  %s1397, 512, %s1399, [#allocation10], 128, 128, 8
    $region49: #{tpu_custom_call.1} parent=1 // pred_fallthru
      _
    // Predicated region
    $region50: #{tpu_custom_call.1} parent=1 // pred_check
      _
    $region51: #{tpu_custom_call.1} parent=1 // pred_check_branch
      %1406 = sbr.rel (0) target = $region53
    $region52: #{tpu_custom_call.1} parent=1 // pred_region
      %1408 = dma.done [#allocation4], 128
    $region53: #{tpu_custom_call.1} parent=1 // pred_fallthru
      _
    // Predicated region
    $region54: #{tpu_custom_call.1} parent=1 // pred_check
      _
    $region55: #{tpu_custom_call.1} parent=1 // pred_check_branch
      %1410 = sbr.rel (0) target = $region57
    $region56: #{tpu_custom_call.1} parent=1 // pred_region
      %1412 = dma.done [#allocation10], 512
    $region57: #{tpu_custom_call.1} parent=1 // pred_fallthru
      _
    %1413 = vsyncpa [#allocation3], 1
    %1414 = vsyncpa [#allocation6], 1
    %1415 = vsyncpa [#allocation4], 1
    %1416 = vsyncpa [#allocation10], 1

</llo_original>
